<compile_context>
chip_gen: v6e
topology: v6e:2x2x1
jax: 0.10.0
libtpu: 0.0.40
codegen_flags: <defaults>
</compile_context>

<pallas_src>
import functools
import re

import jax
import jax.numpy as jnp
from jax.experimental import pallas as pl
from jax.experimental.pallas import tpu as pltpu


def _round_up(x, m):
    return (x + m - 1) // m * m


def _pad_gate_cols(w, H, H_pad):
    """Pad the last (4*H) gate axis to (4*H_pad), zero-padding each gate block."""
    if H_pad == H:
        return w
    lead = w.shape[:-1]
    w4 = w.reshape(lead + (4, H))
    w4 = jnp.pad(w4, [(0, 0)] * len(lead) + [(0, 0), (0, H_pad - H)])
    return w4.reshape(lead + (4 * H_pad,))


def _tpu_generation():
    """Best-effort TPU generation (5 / 6 / 7 / 0-unknown); falls back to safe defaults."""
    try:
        kind = jax.devices()[0].device_kind.lower()
        m = re.search(r"(\d+)", kind)
        return int(m.group(1)) if m else 0
    except Exception:  # pragma: no cover - defensive
        return 0


# ----------------------------- Pallas kernel -------------------------------
def _lstm_recurrence_kernel(x_ref, wih_ref, whh_ref, b_ref, hout_ref,
                            gx_ref, h_ref, c_ref,
                            *, seq_len, t_blk, act_dtype):
    """One (batch-block, time-block) grid step.

    x_ref    : (T_blk, B_blk, E_pad)   bf16  embedded tokens (streamed)
    wih_ref  : (E_pad, 4*H_pad)        bf16  input->gates weights (resident)
    whh_ref  : (H_pad, 4*H_pad)        bf16  hidden->gates weights (resident)
    b_ref    : (1, 4*H_pad)            f32   fused gate bias
    hout_ref : (B_blk, H_pad)          f32   final hidden state (written at last t block)
    gx_ref   : (T_blk, B_blk, 4*H_pad) f32   VMEM scratch: per-block input projection
    h_ref    : (B_blk, H_pad)          bf16  VMEM scratch, carried across t blocks
    c_ref    : (B_blk, H_pad)          f32   VMEM scratch, carried across t blocks
    """
    t_idx = pl.program_id(1)

    @pl.when(t_idx == 0)
    def _():
        h_ref[...] = jnp.zeros_like(h_ref)
        c_ref[...] = jnp.zeros_like(c_ref)

    Tb, Bb, Ep = x_ref.shape
    Hp = whh_ref.shape[0]                      # H_pad (multiple of 128 -> lane aligned)

    # Whole-time-block input projection: one bf16 MXU matmul, off the serial
    # h-dependency chain (pipelines under the recurrence of this / next block).
    x2 = x_ref[...].reshape(Tb * Bb, Ep)
    gx = jnp.dot(x2, wih_ref[...], preferred_element_type=jnp.float32)
    gx = gx + b_ref[...]                       # (1, 4*H_pad) broadcast, f32 bias
    gx_ref[...] = gx.reshape(Tb, Bb, 4 * Hp)

    whh = whh_ref[...]                         # resident bf16 hidden->gate weights
    t_base = t_idx * t_blk
    needs_mask = (seq_len % t_blk) != 0        # Python bool: only mask if T was padded

    def step(t, carry):
        h, c = carry                           # h: bf16, c: f32
        # Single per-step matmul on the serial critical path (bf16 MXU, f32 acc).
        gates = gx_ref[t] + jnp.dot(h, whh, preferred_element_type=jnp.float32)
        ga = gates.astype(act_dtype)           # bf16 nonlinearities on v6e/v7x, f32 on v5e
        i = jax.nn.sigmoid(ga[:, 0 * Hp:1 * Hp])
        f = jax.nn.sigmoid(ga[:, 1 * Hp:2 * Hp])
        g = jnp.tanh(ga[:, 2 * Hp:3 * Hp])
        o = jax.nn.sigmoid(ga[:, 3 * Hp:4 * Hp])
        c_new = f * c + i * g                  # mixed precision -> f32 carry
        h_new = (o * jnp.tanh(c_new.astype(act_dtype))).astype(jnp.bfloat16)
        if needs_mask:                         # time-padding steps keep the previous state
            valid = (t_base + t) < seq_len
            h_new = jnp.where(valid, h_new, h)
            c_new = jnp.where(valid, c_new, c)
        return h_new, c_new

    h_out, c_out = jax.lax.fori_loop(0, t_blk, step, (h_ref[...], c_ref[...]),
                                     unroll=min(t_blk, 8))
    h_ref[...] = h_out
    c_ref[...] = c_out

    @pl.when(t_idx == pl.num_programs(1) - 1)
    def _():
        hout_ref[...] = h_out.astype(jnp.float32)


# ------------------------------ forward pass --------------------------------
def lstm_classifier_forward(tokens, lengths, params):
    # TODO(synk): `lengths` is unused, matching the reference which runs the full
    # padded sequence and takes ht[-1] (no pack_padded_sequence semantics).
    del lengths

    emb = params["embedding"]              # (V, E)
    w_ih_t = params["w_ih_t"]              # (E, 4H)
    w_hh_t = params["w_hh_t"]              # (H, 4H)
    b_gates = params["b_gates"]            # (4H,)
    w_lin_t = params["w_lin_t"]            # (H, O)
    b_lin = params["b_lin"]                # (O,)

    B, T = tokens.shape
    E = emb.shape[1]
    H = w_hh_t.shape[0]

    gen = _tpu_generation()
    # v5e has no bf16 VPU/EUP -> keep f32 nonlinearities there (and when unknown).
    act_dtype = jnp.bfloat16 if gen >= 6 else jnp.float32

    # ---- layout / tiling choices -------------------------------------------
    H_pad = _round_up(H, 128)              # lane-aligned gate slices
    E_pad = _round_up(E, 128)              # lane-aligned matmul K dim
    B_pad = _round_up(B, 8)                # full sublanes
    if gen >= 7 and 128 <= B_pad < 256:
        # v7x has 2 TensorCores: guarantee >=2 batch blocks on the parallel axis.
        B_blk = _round_up(B_pad // 2, 8)
    else:
        B_blk = min(B_pad, 128)            # MXU-friendly M tile
    B_pad = _round_up(B_pad, B_blk)

    # Generation-aware VMEM budget: v5e/v6e have 128 MiB VMEM, v7x only 64 MiB.
    vmem_cap = (100 << 20) if gen in (5, 6) else (48 << 20)
    wih_bytes = E_pad * 4 * H_pad * 2
    whh_bytes = H_pad * 4 * H_pad * 2
    out_bytes = B_blk * H_pad * 4
    state_bytes = B_blk * H_pad * (2 + 4)          # bf16 h + f32 c scratch
    fixed_bytes = (2 * (wih_bytes + whh_bytes)     # (double-buffered) resident weights
                   + 2 * out_bytes + state_bytes + (6 << 20))   # + slack
    per_t_bytes = B_blk * (4 * H_pad * 4           # in-kernel f32 gates scratch
                           + 2 * E_pad * 2)        # double-buffered bf16 x stream
    t_budget = max(vmem_cap - fixed_bytes, 2 << 20)
    T_blk = int(max(1, min(T, 64, t_budget // per_t_bytes)))
    T_pad = _round_up(T, T_blk)

    # ---- gate-aligned, zero-padded weights ----------------------------------
    w_ih_p = _pad_gate_cols(w_ih_t, H, H_pad)                       # (E, 4H_pad)
    w_ih_p = jnp.pad(w_ih_p, ((0, E_pad - E), (0, 0))).astype(jnp.bfloat16)
    w_hh_p = _pad_gate_cols(w_hh_t, H, H_pad)                       # (H, 4H_pad)
    w_hh_p = jnp.pad(w_hh_p, ((0, H_pad - H), (0, 0))).astype(jnp.bfloat16)
    b_p = _pad_gate_cols(b_gates, H, H_pad).reshape(1, 4 * H_pad)   # (1, 4H_pad) f32

    # ---- phase 1 (XLA): time-major bf16 embedding gather --------------------
    # Pad the (cheap, int32) token array along B and T up front instead of
    # padding any large activation afterwards.
    tokens_p = jnp.pad(tokens, ((0, B_pad - B), (0, T_pad - T)))
    emb_p = jnp.pad(emb, ((0, 0), (0, E_pad - E))).astype(jnp.bfloat16)
    x_tm = jnp.take(emb_p, tokens_p.T, axis=0)      # (T_pad, B_pad, E_pad) bf16
    # TODO(synk): nn.Dropout(0.2) is identity in eval mode; no train-mode mask.

    # ---- phase 2 (Pallas): input projection + serial recurrence --------------
    grid = (B_pad // B_blk, T_pad // T_blk)
    gx_scratch_bytes = T_blk * B_blk * 4 * H_pad * 4
    x_block_bytes = T_blk * B_blk * E_pad * 2
    vmem_limit = int(min(max(fixed_bytes + gx_scratch_bytes + 2 * x_block_bytes,
                             32 << 20), vmem_cap))

    kernel = functools.partial(_lstm_recurrence_kernel,
                               seq_len=T, t_blk=T_blk, act_dtype=act_dtype)
    h_last = pl.pallas_call(
        kernel,
        out_shape=jax.ShapeDtypeStruct((B_pad, H_pad), jnp.float32),
        grid=grid,
        in_specs=[
            pl.BlockSpec((T_blk, B_blk, E_pad), lambda b, t: (t, b, 0)),   # x stream
            pl.BlockSpec((E_pad, 4 * H_pad), lambda b, t: (0, 0)),         # W_ih resident
            pl.BlockSpec((H_pad, 4 * H_pad), lambda b, t: (0, 0)),         # W_hh resident
            pl.BlockSpec((1, 4 * H_pad), lambda b, t: (0, 0)),             # bias resident
        ],
        out_specs=pl.BlockSpec((B_blk, H_pad), lambda b, t: (b, 0)),
        scratch_shapes=[
            pltpu.VMEM((T_blk, B_blk, 4 * H_pad), jnp.float32),   # per-block gates
            pltpu.VMEM((B_blk, H_pad), jnp.bfloat16),             # h carry (bf16)
            pltpu.VMEM((B_blk, H_pad), jnp.float32),              # c carry (f32)
        ],
        compiler_params=pltpu.CompilerParams(
            dimension_semantics=("parallel", "arbitrary"),
            vmem_limit_bytes=vmem_limit),
    )(x_tm, w_ih_p, w_hh_p, b_p)

    # ---- phase 3 (XLA): tiny 9-wide classifier head --------------------------
    logits = jnp.dot(h_last[:B, :H], w_lin_t,
                     preferred_element_type=jnp.float32) + b_lin[None, :]
    return logits


# --------------------------- parameter creation -----------------------------
def init_params(key, vocab_size, embedding_dim, hidden_dim, output_dim=9):
    ks = jax.random.split(key, 6)
    E, H, O = embedding_dim, hidden_dim, output_dim
    bound = 1.0 / jnp.sqrt(jnp.float32(H))

    emb = jax.random.normal(ks[0], (vocab_size, E), jnp.float32)
    emb = emb.at[0].set(0.0)                        # padding_idx=0 row zeroed

    w_ih = jax.random.uniform(ks[1], (4 * H, E), jnp.float32, -bound, bound)
    w_hh = jax.random.uniform(ks[2], (4 * H, H), jnp.float32, -bound, bound)
    b_ih = jax.random.uniform(ks[3], (4 * H,), jnp.float32, -bound, bound)
    b_hh = jax.random.uniform(ks[4], (4 * H,), jnp.float32, -bound, bound)

    w_lin = jax.random.uniform(ks[5], (O, H), jnp.float32, -bound, bound)
    b_lin = jnp.zeros((O,), jnp.float32)

    return {
        "embedding": emb,
        "w_ih_t": w_ih.T,                           # (E, 4H)
        "w_hh_t": w_hh.T,                           # (H, 4H)
        "b_gates": b_ih + b_hh,                     # (4H,)  (i, f, g, o order)
        "w_lin_t": w_lin.T,                         # (H, O)
        "b_lin": b_lin,                             # (O,)
    }


if __name__ == "__main__":
    VOCAB, EMB, HID = 50, 32, 32
    B, T = 2, 8

    key = jax.random.PRNGKey(0)
    k_tok, k_param = jax.random.split(key)

    tokens = jax.random.randint(k_tok, (B, T), 0, VOCAB, dtype=jnp.int32)
    lengths = jnp.full((B,), T, dtype=jnp.int32)

    params = init_params(k_param, VOCAB, EMB, HID)

    logits = jax.jit(lstm_classifier_forward)(tokens, lengths, params)
    jax.block_until_ready(logits)
    assert logits.shape == (B, 9) and logits.dtype == jnp.float32
    assert bool(jnp.all(jnp.isfinite(logits)))
    print("KERNEL_OK")
</pallas_src>

<mosaic_0001>
module attributes {stable_mosaic.version = 11 : i64} {
  func.func @_lstm_recurrence_kernel(%arg0: i32, %arg1: i32, %arg2: memref<8x8x128xbf16, #tpu.memory_space<vmem>>, %arg3: memref<128x512xbf16, #tpu.memory_space<vmem>>, %arg4: memref<128x512xbf16, #tpu.memory_space<vmem>>, %arg5: memref<1x512xf32, #tpu.memory_space<vmem>>, %arg6: memref<8x128xf32, #tpu.memory_space<vmem>>, %arg7: memref<8x8x512xf32, #tpu.memory_space<vmem>>, %arg8: memref<8x128xbf16, #tpu.memory_space<vmem>>, %arg9: memref<8x128xf32, #tpu.memory_space<vmem>>) attributes {dimension_semantics = [#tpu.dimension_semantics<parallel>, #tpu.dimension_semantics<arbitrary>], iteration_bounds = array<i64: 1, 1>, scalar_prefetch = 0 : i64, scratch_operands = 3 : i64, tpu.core_type = #tpu.core_type<tc>, window_params = [{transform_indices = @transform_0, window_bounds = array<i64: 8, 8, 128>}, {pipeline_mode = #tpu.pipeline_mode<synchronous>, transform_indices = @transform_1, window_bounds = array<i64: 128, 512>}, {pipeline_mode = #tpu.pipeline_mode<synchronous>, transform_indices = @transform_2, window_bounds = array<i64: 128, 512>}, {pipeline_mode = #tpu.pipeline_mode<synchronous>, transform_indices = @transform_3, window_bounds = array<i64: 1, 512>}, {transform_indices = @transform_4, window_bounds = array<i64: 8, 128>}]} {
    %c0_i32 = arith.constant 0 : i32
    %0 = arith.cmpi eq, %arg1, %c0_i32 : i32
    %1 = arith.extui %0 : i1 to i32
    %c0_i32_0 = arith.constant 0 : i32
    %2 = arith.cmpi ne, %1, %c0_i32_0 : i32
    scf.if %2 {
      %cst_71 = arith.constant 0.000000e+00 : bf16
      %268 = vector.broadcast %cst_71 : bf16 to vector<8x128xbf16>
      %c0_72 = arith.constant 0 : index
      %c0_73 = arith.constant 0 : index
      %269 = vector.load %arg8[%c0_72, %c0_73] : memref<8x128xbf16, #tpu.memory_space<vmem>>, vector<8x128xbf16>
      tpu.vector_store %arg8[%c0_72, %c0_73], %268 {strides = array<i32>} : memref<8x128xbf16, #tpu.memory_space<vmem>>, vector<8x128xbf16>,
      %cst_74 = arith.constant 0.000000e+00 : f32
      %270 = vector.broadcast %cst_74 : f32 to vector<8x128xf32>
      %c0_75 = arith.constant 0 : index
      %c0_76 = arith.constant 0 : index
      %271 = vector.load %arg9[%c0_75, %c0_76] : memref<8x128xf32, #tpu.memory_space<vmem>>, vector<8x128xf32>
      tpu.vector_store %arg9[%c0_75, %c0_76], %270 {strides = array<i32>} : memref<8x128xf32, #tpu.memory_space<vmem>>, vector<8x128xf32>,
    } else {
    }
    %c0 = arith.constant 0 : index
    %c0_1 = arith.constant 0 : index
    %c0_2 = arith.constant 0 : index
    %3 = vector.load %arg2[%c0, %c0_1, %c0_2] : memref<8x8x128xbf16, #tpu.memory_space<vmem>>, vector<8x8x128xbf16>
    %4 = vector.shape_cast %3 : vector<8x8x128xbf16> to vector<64x128xbf16>
    %c0_3 = arith.constant 0 : index
    %c0_4 = arith.constant 0 : index
    %5 = vector.load %arg3[%c0_3, %c0_4] : memref<128x512xbf16, #tpu.memory_space<vmem>>, vector<128x512xbf16>
    %cst = arith.constant dense<0.000000e+00> : vector<64x512xf32>
    %6 = tpu.matmul %4, %5, %cst {dimension_numbers = #tpu.dot_dimension_numbers<[1], [0], [0], [1], [0, 0, 1, 1], [], []>} : vector<64x128xbf16>, vector<128x512xbf16>, vector<64x512xf32> -> vector<64x512xf32>
    %c0_5 = arith.constant 0 : index
    %c0_6 = arith.constant 0 : index
    %7 = vector.load %arg5[%c0_5, %c0_6] : memref<1x512xf32, #tpu.memory_space<vmem>>, vector<1x512xf32>
    %8 = vector.broadcast %7 : vector<1x512xf32> to vector<64x512xf32>
    %9 = arith.addf %6, %8 : vector<64x512xf32>
    %10 = vector.shape_cast %9 : vector<64x512xf32> to vector<8x8x512xf32>
    %c0_7 = arith.constant 0 : index
    %c0_8 = arith.constant 0 : index
    %c0_9 = arith.constant 0 : index
    %11 = vector.load %arg7[%c0_7, %c0_8, %c0_9] : memref<8x8x512xf32, #tpu.memory_space<vmem>>, vector<8x8x512xf32>
    tpu.vector_store %arg7[%c0_7, %c0_8, %c0_9], %10 {strides = array<i32>} : memref<8x8x512xf32, #tpu.memory_space<vmem>>, vector<8x8x512xf32>,
    %c0_10 = arith.constant 0 : index
    %c0_11 = arith.constant 0 : index
    %12 = vector.load %arg4[%c0_10, %c0_11] : memref<128x512xbf16, #tpu.memory_space<vmem>>, vector<128x512xbf16>
    %c0_12 = arith.constant 0 : index
    %c0_13 = arith.constant 0 : index
    %13 = vector.load %arg8[%c0_12, %c0_13] : memref<8x128xbf16, #tpu.memory_space<vmem>>, vector<8x128xbf16>
    %c0_14 = arith.constant 0 : index
    %c0_15 = arith.constant 0 : index
    %14 = vector.load %arg9[%c0_14, %c0_15] : memref<8x128xf32, #tpu.memory_space<vmem>>, vector<8x128xf32>
    %c0_i32_16 = arith.constant 0 : i32
    %15 = arith.index_cast %c0_i32_16 : i32 to index
    %c0_17 = arith.constant 0 : index
    %c0_18 = arith.constant 0 : index
    %16 = vector.load %arg7[%15, %c0_17, %c0_18] : memref<8x8x512xf32, #tpu.memory_space<vmem>>, vector<1x8x512xf32>
    %17 = vector.shape_cast %16 : vector<1x8x512xf32> to vector<8x512xf32>
    %cst_19 = arith.constant dense<0.000000e+00> : vector<8x512xf32>
    %18 = tpu.matmul %13, %12, %cst_19 {dimension_numbers = #tpu.dot_dimension_numbers<[1], [0], [0], [1], [0, 0, 1, 1], [], []>} : vector<8x128xbf16>, vector<128x512xbf16>, vector<8x512xf32> -> vector<8x512xf32>
    %19 = arith.addf %17, %18 : vector<8x512xf32>
    %20 = vector.extract_strided_slice %19 {offsets = [0, 0], sizes = [8, 128], strides = [1, 1]} : vector<8x512xf32> to vector<8x128xf32>
    %21 = arith.negf %20 : vector<8x128xf32>
    %22 = math.exp %21 : vector<8x128xf32>
    %cst_20 = arith.constant 1.000000e+00 : f32
    %23 = vector.broadcast %cst_20 : f32 to vector<8x128xf32>
    %24 = arith.addf %23, %22 : vector<8x128xf32>
    %25 = arith.divf %23, %24 : vector<8x128xf32>
    %26 = vector.extract_strided_slice %19 {offsets = [0, 128], sizes = [8, 128], strides = [1, 1]} : vector<8x512xf32> to vector<8x128xf32>
    %27 = arith.negf %26 : vector<8x128xf32>
    %28 = math.exp %27 : vector<8x128xf32>
    %cst_21 = arith.constant 1.000000e+00 : f32
    %29 = vector.broadcast %cst_21 : f32 to vector<8x128xf32>
    %30 = arith.addf %29, %28 : vector<8x128xf32>
    %31 = arith.divf %29, %30 : vector<8x128xf32>
    %32 = vector.extract_strided_slice %19 {offsets = [0, 256], sizes = [8, 128], strides = [1, 1]} : vector<8x512xf32> to vector<8x128xf32>
    %33 = math.tanh %32 : vector<8x128xf32>
    %34 = vector.extract_strided_slice %19 {offsets = [0, 384], sizes = [8, 128], strides = [1, 1]} : vector<8x512xf32> to vector<8x128xf32>
    %35 = arith.negf %34 : vector<8x128xf32>
    %36 = math.exp %35 : vector<8x128xf32>
    %cst_22 = arith.constant 1.000000e+00 : f32
    %37 = vector.broadcast %cst_22 : f32 to vector<8x128xf32>
    %38 = arith.addf %37, %36 : vector<8x128xf32>
    %39 = arith.divf %37, %38 : vector<8x128xf32>
    %40 = arith.mulf %31, %14 : vector<8x128xf32>
    %41 = arith.mulf %25, %33 : vector<8x128xf32>
    %42 = arith.addf %40, %41 : vector<8x128xf32>
    %43 = math.tanh %42 : vector<8x128xf32>
    %44 = arith.mulf %39, %43 : vector<8x128xf32>
    %45 = arith.truncf %44 : vector<8x128xf32> to vector<8x128xbf16>
    %c1_i32 = arith.constant 1 : i32
    %46 = arith.index_cast %c1_i32 : i32 to index
    %c0_23 = arith.constant 0 : index
    %c0_24 = arith.constant 0 : index
    %47 = vector.load %arg7[%46, %c0_23, %c0_24] : memref<8x8x512xf32, #tpu.memory_space<vmem>>, vector<1x8x512xf32>
    %48 = vector.shape_cast %47 : vector<1x8x512xf32> to vector<8x512xf32>
    %cst_25 = arith.constant dense<0.000000e+00> : vector<8x512xf32>
    %49 = tpu.matmul %45, %12, %cst_25 {dimension_numbers = #tpu.dot_dimension_numbers<[1], [0], [0], [1], [0, 0, 1, 1], [], []>} : vector<8x128xbf16>, vector<128x512xbf16>, vector<8x512xf32> -> vector<8x512xf32>
    %50 = arith.addf %48, %49 : vector<8x512xf32>
    %51 = vector.extract_strided_slice %50 {offsets = [0, 0], sizes = [8, 128], strides = [1, 1]} : vector<8x512xf32> to vector<8x128xf32>
    %52 = arith.negf %51 : vector<8x128xf32>
    %53 = math.exp %52 : vector<8x128xf32>
    %cst_26 = arith.constant 1.000000e+00 : f32
    %54 = vector.broadcast %cst_26 : f32 to vector<8x128xf32>
    %55 = arith.addf %54, %53 : vector<8x128xf32>
    %56 = arith.divf %54, %55 : vector<8x128xf32>
    %57 = vector.extract_strided_slice %50 {offsets = [0, 128], sizes = [8, 128], strides = [1, 1]} : vector<8x512xf32> to vector<8x128xf32>
    %58 = arith.negf %57 : vector<8x128xf32>
    %59 = math.exp %58 : vector<8x128xf32>
    %cst_27 = arith.constant 1.000000e+00 : f32
    %60 = vector.broadcast %cst_27 : f32 to vector<8x128xf32>
    %61 = arith.addf %60, %59 : vector<8x128xf32>
    %62 = arith.divf %60, %61 : vector<8x128xf32>
    %63 = vector.extract_strided_slice %50 {offsets = [0, 256], sizes = [8, 128], strides = [1, 1]} : vector<8x512xf32> to vector<8x128xf32>
    %64 = math.tanh %63 : vector<8x128xf32>
    %65 = vector.extract_strided_slice %50 {offsets = [0, 384], sizes = [8, 128], strides = [1, 1]} : vector<8x512xf32> to vector<8x128xf32>
    %66 = arith.negf %65 : vector<8x128xf32>
    %67 = math.exp %66 : vector<8x128xf32>
    %cst_28 = arith.constant 1.000000e+00 : f32
    %68 = vector.broadcast %cst_28 : f32 to vector<8x128xf32>
    %69 = arith.addf %68, %67 : vector<8x128xf32>
    %70 = arith.divf %68, %69 : vector<8x128xf32>
    %71 = arith.mulf %62, %42 : vector<8x128xf32>
    %72 = arith.mulf %56, %64 : vector<8x128xf32>
    %73 = arith.addf %71, %72 : vector<8x128xf32>
    %74 = math.tanh %73 : vector<8x128xf32>
    %75 = arith.mulf %70, %74 : vector<8x128xf32>
    %76 = arith.truncf %75 : vector<8x128xf32> to vector<8x128xbf16>
    %c2_i32 = arith.constant 2 : i32
    %77 = arith.index_cast %c2_i32 : i32 to index
    %c0_29 = arith.constant 0 : index
    %c0_30 = arith.constant 0 : index
    %78 = vector.load %arg7[%77, %c0_29, %c0_30] : memref<8x8x512xf32, #tpu.memory_space<vmem>>, vector<1x8x512xf32>
    %79 = vector.shape_cast %78 : vector<1x8x512xf32> to vector<8x512xf32>
    %cst_31 = arith.constant dense<0.000000e+00> : vector<8x512xf32>
    %80 = tpu.matmul %76, %12, %cst_31 {dimension_numbers = #tpu.dot_dimension_numbers<[1], [0], [0], [1], [0, 0, 1, 1], [], []>} : vector<8x128xbf16>, vector<128x512xbf16>, vector<8x512xf32> -> vector<8x512xf32>
    %81 = arith.addf %79, %80 : vector<8x512xf32>
    %82 = vector.extract_strided_slice %81 {offsets = [0, 0], sizes = [8, 128], strides = [1, 1]} : vector<8x512xf32> to vector<8x128xf32>
    %83 = arith.negf %82 : vector<8x128xf32>
    %84 = math.exp %83 : vector<8x128xf32>
    %cst_32 = arith.constant 1.000000e+00 : f32
    %85 = vector.broadcast %cst_32 : f32 to vector<8x128xf32>
    %86 = arith.addf %85, %84 : vector<8x128xf32>
    %87 = arith.divf %85, %86 : vector<8x128xf32>
    %88 = vector.extract_strided_slice %81 {offsets = [0, 128], sizes = [8, 128], strides = [1, 1]} : vector<8x512xf32> to vector<8x128xf32>
    %89 = arith.negf %88 : vector<8x128xf32>
    %90 = math.exp %89 : vector<8x128xf32>
    %cst_33 = arith.constant 1.000000e+00 : f32
    %91 = vector.broadcast %cst_33 : f32 to vector<8x128xf32>
    %92 = arith.addf %91, %90 : vector<8x128xf32>
    %93 = arith.divf %91, %92 : vector<8x128xf32>
    %94 = vector.extract_strided_slice %81 {offsets = [0, 256], sizes = [8, 128], strides = [1, 1]} : vector<8x512xf32> to vector<8x128xf32>
    %95 = math.tanh %94 : vector<8x128xf32>
    %96 = vector.extract_strided_slice %81 {offsets = [0, 384], sizes = [8, 128], strides = [1, 1]} : vector<8x512xf32> to vector<8x128xf32>
    %97 = arith.negf %96 : vector<8x128xf32>
    %98 = math.exp %97 : vector<8x128xf32>
    %cst_34 = arith.constant 1.000000e+00 : f32
    %99 = vector.broadcast %cst_34 : f32 to vector<8x128xf32>
    %100 = arith.addf %99, %98 : vector<8x128xf32>
    %101 = arith.divf %99, %100 : vector<8x128xf32>
    %102 = arith.mulf %93, %73 : vector<8x128xf32>
    %103 = arith.mulf %87, %95 : vector<8x128xf32>
    %104 = arith.addf %102, %103 : vector<8x128xf32>
    %105 = math.tanh %104 : vector<8x128xf32>
    %106 = arith.mulf %101, %105 : vector<8x128xf32>
    %107 = arith.truncf %106 : vector<8x128xf32> to vector<8x128xbf16>
    %c3_i32 = arith.constant 3 : i32
    %108 = arith.index_cast %c3_i32 : i32 to index
    %c0_35 = arith.constant 0 : index
    %c0_36 = arith.constant 0 : index
    %109 = vector.load %arg7[%108, %c0_35, %c0_36] : memref<8x8x512xf32, #tpu.memory_space<vmem>>, vector<1x8x512xf32>
    %110 = vector.shape_cast %109 : vector<1x8x512xf32> to vector<8x512xf32>
    %cst_37 = arith.constant dense<0.000000e+00> : vector<8x512xf32>
    %111 = tpu.matmul %107, %12, %cst_37 {dimension_numbers = #tpu.dot_dimension_numbers<[1], [0], [0], [1], [0, 0, 1, 1], [], []>} : vector<8x128xbf16>, vector<128x512xbf16>, vector<8x512xf32> -> vector<8x512xf32>
    %112 = arith.addf %110, %111 : vector<8x512xf32>
    %113 = vector.extract_strided_slice %112 {offsets = [0, 0], sizes = [8, 128], strides = [1, 1]} : vector<8x512xf32> to vector<8x128xf32>
    %114 = arith.negf %113 : vector<8x128xf32>
    %115 = math.exp %114 : vector<8x128xf32>
    %cst_38 = arith.constant 1.000000e+00 : f32
    %116 = vector.broadcast %cst_38 : f32 to vector<8x128xf32>
    %117 = arith.addf %116, %115 : vector<8x128xf32>
    %118 = arith.divf %116, %117 : vector<8x128xf32>
    %119 = vector.extract_strided_slice %112 {offsets = [0, 128], sizes = [8, 128], strides = [1, 1]} : vector<8x512xf32> to vector<8x128xf32>
    %120 = arith.negf %119 : vector<8x128xf32>
    %121 = math.exp %120 : vector<8x128xf32>
    %cst_39 = arith.constant 1.000000e+00 : f32
    %122 = vector.broadcast %cst_39 : f32 to vector<8x128xf32>
    %123 = arith.addf %122, %121 : vector<8x128xf32>
    %124 = arith.divf %122, %123 : vector<8x128xf32>
    %125 = vector.extract_strided_slice %112 {offsets = [0, 256], sizes = [8, 128], strides = [1, 1]} : vector<8x512xf32> to vector<8x128xf32>
    %126 = math.tanh %125 : vector<8x128xf32>
    %127 = vector.extract_strided_slice %112 {offsets = [0, 384], sizes = [8, 128], strides = [1, 1]} : vector<8x512xf32> to vector<8x128xf32>
    %128 = arith.negf %127 : vector<8x128xf32>
    %129 = math.exp %128 : vector<8x128xf32>
    %cst_40 = arith.constant 1.000000e+00 : f32
    %130 = vector.broadcast %cst_40 : f32 to vector<8x128xf32>
    %131 = arith.addf %130, %129 : vector<8x128xf32>
    %132 = arith.divf %130, %131 : vector<8x128xf32>
    %133 = arith.mulf %124, %104 : vector<8x128xf32>
    %134 = arith.mulf %118, %126 : vector<8x128xf32>
    %135 = arith.addf %133, %134 : vector<8x128xf32>
    %136 = math.tanh %135 : vector<8x128xf32>
    %137 = arith.mulf %132, %136 : vector<8x128xf32>
    %138 = arith.truncf %137 : vector<8x128xf32> to vector<8x128xbf16>
    %c4_i32 = arith.constant 4 : i32
    %139 = arith.index_cast %c4_i32 : i32 to index
    %c0_41 = arith.constant 0 : index
    %c0_42 = arith.constant 0 : index
    %140 = vector.load %arg7[%139, %c0_41, %c0_42] : memref<8x8x512xf32, #tpu.memory_space<vmem>>, vector<1x8x512xf32>
    %141 = vector.shape_cast %140 : vector<1x8x512xf32> to vector<8x512xf32>
    %cst_43 = arith.constant dense<0.000000e+00> : vector<8x512xf32>
    %142 = tpu.matmul %138, %12, %cst_43 {dimension_numbers = #tpu.dot_dimension_numbers<[1], [0], [0], [1], [0, 0, 1, 1], [], []>} : vector<8x128xbf16>, vector<128x512xbf16>, vector<8x512xf32> -> vector<8x512xf32>
    %143 = arith.addf %141, %142 : vector<8x512xf32>
    %144 = vector.extract_strided_slice %143 {offsets = [0, 0], sizes = [8, 128], strides = [1, 1]} : vector<8x512xf32> to vector<8x128xf32>
    %145 = arith.negf %144 : vector<8x128xf32>
    %146 = math.exp %145 : vector<8x128xf32>
    %cst_44 = arith.constant 1.000000e+00 : f32
    %147 = vector.broadcast %cst_44 : f32 to vector<8x128xf32>
    %148 = arith.addf %147, %146 : vector<8x128xf32>
    %149 = arith.divf %147, %148 : vector<8x128xf32>
    %150 = vector.extract_strided_slice %143 {offsets = [0, 128], sizes = [8, 128], strides = [1, 1]} : vector<8x512xf32> to vector<8x128xf32>
    %151 = arith.negf %150 : vector<8x128xf32>
    %152 = math.exp %151 : vector<8x128xf32>
    %cst_45 = arith.constant 1.000000e+00 : f32
    %153 = vector.broadcast %cst_45 : f32 to vector<8x128xf32>
    %154 = arith.addf %153, %152 : vector<8x128xf32>
    %155 = arith.divf %153, %154 : vector<8x128xf32>
    %156 = vector.extract_strided_slice %143 {offsets = [0, 256], sizes = [8, 128], strides = [1, 1]} : vector<8x512xf32> to vector<8x128xf32>
    %157 = math.tanh %156 : vector<8x128xf32>
    %158 = vector.extract_strided_slice %143 {offsets = [0, 384], sizes = [8, 128], strides = [1, 1]} : vector<8x512xf32> to vector<8x128xf32>
    %159 = arith.negf %158 : vector<8x128xf32>
    %160 = math.exp %159 : vector<8x128xf32>
    %cst_46 = arith.constant 1.000000e+00 : f32
    %161 = vector.broadcast %cst_46 : f32 to vector<8x128xf32>
    %162 = arith.addf %161, %160 : vector<8x128xf32>
    %163 = arith.divf %161, %162 : vector<8x128xf32>
    %164 = arith.mulf %155, %135 : vector<8x128xf32>
    %165 = arith.mulf %149, %157 : vector<8x128xf32>
    %166 = arith.addf %164, %165 : vector<8x128xf32>
    %167 = math.tanh %166 : vector<8x128xf32>
    %168 = arith.mulf %163, %167 : vector<8x128xf32>
    %169 = arith.truncf %168 : vector<8x128xf32> to vector<8x128xbf16>
    %c5_i32 = arith.constant 5 : i32
    %170 = arith.index_cast %c5_i32 : i32 to index
    %c0_47 = arith.constant 0 : index
    %c0_48 = arith.constant 0 : index
    %171 = vector.load %arg7[%170, %c0_47, %c0_48] : memref<8x8x512xf32, #tpu.memory_space<vmem>>, vector<1x8x512xf32>
    %172 = vector.shape_cast %171 : vector<1x8x512xf32> to vector<8x512xf32>
    %cst_49 = arith.constant dense<0.000000e+00> : vector<8x512xf32>
    %173 = tpu.matmul %169, %12, %cst_49 {dimension_numbers = #tpu.dot_dimension_numbers<[1], [0], [0], [1], [0, 0, 1, 1], [], []>} : vector<8x128xbf16>, vector<128x512xbf16>, vector<8x512xf32> -> vector<8x512xf32>
    %174 = arith.addf %172, %173 : vector<8x512xf32>
    %175 = vector.extract_strided_slice %174 {offsets = [0, 0], sizes = [8, 128], strides = [1, 1]} : vector<8x512xf32> to vector<8x128xf32>
    %176 = arith.negf %175 : vector<8x128xf32>
    %177 = math.exp %176 : vector<8x128xf32>
    %cst_50 = arith.constant 1.000000e+00 : f32
    %178 = vector.broadcast %cst_50 : f32 to vector<8x128xf32>
    %179 = arith.addf %178, %177 : vector<8x128xf32>
    %180 = arith.divf %178, %179 : vector<8x128xf32>
    %181 = vector.extract_strided_slice %174 {offsets = [0, 128], sizes = [8, 128], strides = [1, 1]} : vector<8x512xf32> to vector<8x128xf32>
    %182 = arith.negf %181 : vector<8x128xf32>
    %183 = math.exp %182 : vector<8x128xf32>
    %cst_51 = arith.constant 1.000000e+00 : f32
    %184 = vector.broadcast %cst_51 : f32 to vector<8x128xf32>
    %185 = arith.addf %184, %183 : vector<8x128xf32>
    %186 = arith.divf %184, %185 : vector<8x128xf32>
    %187 = vector.extract_strided_slice %174 {offsets = [0, 256], sizes = [8, 128], strides = [1, 1]} : vector<8x512xf32> to vector<8x128xf32>
    %188 = math.tanh %187 : vector<8x128xf32>
    %189 = vector.extract_strided_slice %174 {offsets = [0, 384], sizes = [8, 128], strides = [1, 1]} : vector<8x512xf32> to vector<8x128xf32>
    %190 = arith.negf %189 : vector<8x128xf32>
    %191 = math.exp %190 : vector<8x128xf32>
    %cst_52 = arith.constant 1.000000e+00 : f32
    %192 = vector.broadcast %cst_52 : f32 to vector<8x128xf32>
    %193 = arith.addf %192, %191 : vector<8x128xf32>
    %194 = arith.divf %192, %193 : vector<8x128xf32>
    %195 = arith.mulf %186, %166 : vector<8x128xf32>
    %196 = arith.mulf %180, %188 : vector<8x128xf32>
    %197 = arith.addf %195, %196 : vector<8x128xf32>
    %198 = math.tanh %197 : vector<8x128xf32>
    %199 = arith.mulf %194, %198 : vector<8x128xf32>
    %200 = arith.truncf %199 : vector<8x128xf32> to vector<8x128xbf16>
    %c6_i32 = arith.constant 6 : i32
    %201 = arith.index_cast %c6_i32 : i32 to index
    %c0_53 = arith.constant 0 : index
    %c0_54 = arith.constant 0 : index
    %202 = vector.load %arg7[%201, %c0_53, %c0_54] : memref<8x8x512xf32, #tpu.memory_space<vmem>>, vector<1x8x512xf32>
    %203 = vector.shape_cast %202 : vector<1x8x512xf32> to vector<8x512xf32>
    %cst_55 = arith.constant dense<0.000000e+00> : vector<8x512xf32>
    %204 = tpu.matmul %200, %12, %cst_55 {dimension_numbers = #tpu.dot_dimension_numbers<[1], [0], [0], [1], [0, 0, 1, 1], [], []>} : vector<8x128xbf16>, vector<128x512xbf16>, vector<8x512xf32> -> vector<8x512xf32>
    %205 = arith.addf %203, %204 : vector<8x512xf32>
    %206 = vector.extract_strided_slice %205 {offsets = [0, 0], sizes = [8, 128], strides = [1, 1]} : vector<8x512xf32> to vector<8x128xf32>
    %207 = arith.negf %206 : vector<8x128xf32>
    %208 = math.exp %207 : vector<8x128xf32>
    %cst_56 = arith.constant 1.000000e+00 : f32
    %209 = vector.broadcast %cst_56 : f32 to vector<8x128xf32>
    %210 = arith.addf %209, %208 : vector<8x128xf32>
    %211 = arith.divf %209, %210 : vector<8x128xf32>
    %212 = vector.extract_strided_slice %205 {offsets = [0, 128], sizes = [8, 128], strides = [1, 1]} : vector<8x512xf32> to vector<8x128xf32>
    %213 = arith.negf %212 : vector<8x128xf32>
    %214 = math.exp %213 : vector<8x128xf32>
    %cst_57 = arith.constant 1.000000e+00 : f32
    %215 = vector.broadcast %cst_57 : f32 to vector<8x128xf32>
    %216 = arith.addf %215, %214 : vector<8x128xf32>
    %217 = arith.divf %215, %216 : vector<8x128xf32>
    %218 = vector.extract_strided_slice %205 {offsets = [0, 256], sizes = [8, 128], strides = [1, 1]} : vector<8x512xf32> to vector<8x128xf32>
    %219 = math.tanh %218 : vector<8x128xf32>
    %220 = vector.extract_strided_slice %205 {offsets = [0, 384], sizes = [8, 128], strides = [1, 1]} : vector<8x512xf32> to vector<8x128xf32>
    %221 = arith.negf %220 : vector<8x128xf32>
    %222 = math.exp %221 : vector<8x128xf32>
    %cst_58 = arith.constant 1.000000e+00 : f32
    %223 = vector.broadcast %cst_58 : f32 to vector<8x128xf32>
    %224 = arith.addf %223, %222 : vector<8x128xf32>
    %225 = arith.divf %223, %224 : vector<8x128xf32>
    %226 = arith.mulf %217, %197 : vector<8x128xf32>
    %227 = arith.mulf %211, %219 : vector<8x128xf32>
    %228 = arith.addf %226, %227 : vector<8x128xf32>
    %229 = math.tanh %228 : vector<8x128xf32>
    %230 = arith.mulf %225, %229 : vector<8x128xf32>
    %231 = arith.truncf %230 : vector<8x128xf32> to vector<8x128xbf16>
    %c7_i32 = arith.constant 7 : i32
    %232 = arith.index_cast %c7_i32 : i32 to index
    %c0_59 = arith.constant 0 : index
    %c0_60 = arith.constant 0 : index
    %233 = vector.load %arg7[%232, %c0_59, %c0_60] : memref<8x8x512xf32, #tpu.memory_space<vmem>>, vector<1x8x512xf32>
    %234 = vector.shape_cast %233 : vector<1x8x512xf32> to vector<8x512xf32>
    %cst_61 = arith.constant dense<0.000000e+00> : vector<8x512xf32>
    %235 = tpu.matmul %231, %12, %cst_61 {dimension_numbers = #tpu.dot_dimension_numbers<[1], [0], [0], [1], [0, 0, 1, 1], [], []>} : vector<8x128xbf16>, vector<128x512xbf16>, vector<8x512xf32> -> vector<8x512xf32>
    %236 = arith.addf %234, %235 : vector<8x512xf32>
    %237 = vector.extract_strided_slice %236 {offsets = [0, 0], sizes = [8, 128], strides = [1, 1]} : vector<8x512xf32> to vector<8x128xf32>
    %238 = arith.negf %237 : vector<8x128xf32>
    %239 = math.exp %238 : vector<8x128xf32>
    %cst_62 = arith.constant 1.000000e+00 : f32
    %240 = vector.broadcast %cst_62 : f32 to vector<8x128xf32>
    %241 = arith.addf %240, %239 : vector<8x128xf32>
    %242 = arith.divf %240, %241 : vector<8x128xf32>
    %243 = vector.extract_strided_slice %236 {offsets = [0, 128], sizes = [8, 128], strides = [1, 1]} : vector<8x512xf32> to vector<8x128xf32>
    %244 = arith.negf %243 : vector<8x128xf32>
    %245 = math.exp %244 : vector<8x128xf32>
    %cst_63 = arith.constant 1.000000e+00 : f32
    %246 = vector.broadcast %cst_63 : f32 to vector<8x128xf32>
    %247 = arith.addf %246, %245 : vector<8x128xf32>
    %248 = arith.divf %246, %247 : vector<8x128xf32>
    %249 = vector.extract_strided_slice %236 {offsets = [0, 256], sizes = [8, 128], strides = [1, 1]} : vector<8x512xf32> to vector<8x128xf32>
    %250 = math.tanh %249 : vector<8x128xf32>
    %251 = vector.extract_strided_slice %236 {offsets = [0, 384], sizes = [8, 128], strides = [1, 1]} : vector<8x512xf32> to vector<8x128xf32>
    %252 = arith.negf %251 : vector<8x128xf32>
    %253 = math.exp %252 : vector<8x128xf32>
    %cst_64 = arith.constant 1.000000e+00 : f32
    %254 = vector.broadcast %cst_64 : f32 to vector<8x128xf32>
    %255 = arith.addf %254, %253 : vector<8x128xf32>
    %256 = arith.divf %254, %255 : vector<8x128xf32>
    %257 = arith.mulf %248, %228 : vector<8x128xf32>
    %258 = arith.mulf %242, %250 : vector<8x128xf32>
    %259 = arith.addf %257, %258 : vector<8x128xf32>
    %260 = math.tanh %259 : vector<8x128xf32>
    %261 = arith.mulf %256, %260 : vector<8x128xf32>
    %262 = arith.truncf %261 : vector<8x128xf32> to vector<8x128xbf16>
    %c8_i32 = arith.constant 8 : i32
    %c0_65 = arith.constant 0 : index
    %c0_66 = arith.constant 0 : index
    %263 = vector.load %arg8[%c0_65, %c0_66] : memref<8x128xbf16, #tpu.memory_space<vmem>>, vector<8x128xbf16>
    tpu.vector_store %arg8[%c0_65, %c0_66], %262 {strides = array<i32>} : memref<8x128xbf16, #tpu.memory_space<vmem>>, vector<8x128xbf16>,
    %c0_67 = arith.constant 0 : index
    %c0_68 = arith.constant 0 : index
    %264 = vector.load %arg9[%c0_67, %c0_68] : memref<8x128xf32, #tpu.memory_space<vmem>>, vector<8x128xf32>
    tpu.vector_store %arg9[%c0_67, %c0_68], %259 {strides = array<i32>} : memref<8x128xf32, #tpu.memory_space<vmem>>, vector<8x128xf32>,
    %c0_i32_69 = arith.constant 0 : i32
    %265 = arith.cmpi eq, %arg1, %c0_i32_69 : i32
    %266 = arith.extui %265 : i1 to i32
    %c0_i32_70 = arith.constant 0 : i32
    %267 = arith.cmpi ne, %266, %c0_i32_70 : i32
    scf.if %267 {
      %268 = arith.extf %262 : vector<8x128xbf16> to vector<8x128xf32>
      %c0_71 = arith.constant 0 : index
      %c0_72 = arith.constant 0 : index
      %269 = vector.load %arg6[%c0_71, %c0_72] : memref<8x128xf32, #tpu.memory_space<vmem>>, vector<8x128xf32>
      tpu.vector_store %arg6[%c0_71, %c0_72], %268 {strides = array<i32>} : memref<8x128xf32, #tpu.memory_space<vmem>>, vector<8x128xf32>,
    } else {
    }
    return
  }
  func.func @transform_0(%arg0: i32, %arg1: i32) -> (i32, i32, i32) {
    %c0_i32 = arith.constant 0 : i32
    %c0_i32_0 = arith.constant 0 : i32
    return %arg1, %arg0, %c0_i32 : i32, i32, i32
  }
  func.func @transform_1(%arg0: i32, %arg1: i32) -> (i32, i32) {
    %c0_i32 = arith.constant 0 : i32
    %c0_i32_0 = arith.constant 0 : i32
    %c0_i32_1 = arith.constant 0 : i32
    return %c0_i32, %c0_i32_0 : i32, i32
  }
  func.func @transform_2(%arg0: i32, %arg1: i32) -> (i32, i32) {
    %c0_i32 = arith.constant 0 : i32
    %c0_i32_0 = arith.constant 0 : i32
    %c0_i32_1 = arith.constant 0 : i32
    return %c0_i32, %c0_i32_0 : i32, i32
  }
  func.func @transform_3(%arg0: i32, %arg1: i32) -> (i32, i32) {
    %c0_i32 = arith.constant 0 : i32
    %c0_i32_0 = arith.constant 0 : i32
    %c0_i32_1 = arith.constant 0 : i32
    return %c0_i32, %c0_i32_0 : i32, i32
  }
  func.func @transform_4(%arg0: i32, %arg1: i32) -> (i32, i32) {
    %c0_i32 = arith.constant 0 : i32
    %c0_i32_0 = arith.constant 0 : i32
    return %arg0, %c0_i32 : i32, i32
  }
}

</mosaic_0001>

<llo_original>
// kernel: lstm_classifier_forward.1
$region0: #{lstm_classifier_forward.1}
  #allocation0 [shape = 'u32[]', space=smem, size = 0x4, offset = 0x4, fixed_abs, tag = 'smem constant byte address 0x4 - core index']
  #allocation1 [shape = 'u32[144,128]{1,0:T(1,128)}', space=vmem, size = 0x12000, scoped, tag = 'internal scratch']
  #allocation2 [shape = 'f32[8,8,512]{2,1,0:T(8,128)}', space=vmem, size = 0x20000, scoped, tag = 'scratch operand']
  #allocation3 [shape = 'bf16[8,128]{1,0:T(8,128)(2,1)}', space=vmem, size = 0x800, scoped, tag = 'scratch operand']
  #allocation4 [shape = 'f32[8,128]{1,0:T(8,128)}', space=vmem, size = 0x1000, scoped, tag = 'scratch operand']
  %s0 = inlined_call_operand.vmem [shape: bf16[8,8,128], index: 0, kind: input, shape index: {}]
  %s1 = inlined_call_operand.vmem [shape: bf16[128,512], index: 1, kind: input, shape index: {}]
  %s2 = inlined_call_operand.vmem [shape: bf16[128,512], index: 2, kind: input, shape index: {}]
  %s3 = inlined_call_operand.vmem [shape: f32[1,512], index: 3, kind: input, shape index: {}]
  %s4 = inlined_call_operand.vmem [shape: f32[8,128], index: 4, kind: output, shape index: {}]
  %s5 = sld [smem:[#allocation0]]
  $region34: #{lstm_classifier_forward.1} parent=0
    _
  %s7 = ssub.s32 1, %s5
  %s8 = scalar_select 0, %s7, %s5
  // Predicated region
  $region2: #{lstm_classifier_forward.1} parent=0 // pred_check
    _
  $region3: #{lstm_classifier_forward.1} parent=0 // pred_check_branch
    %10 = sbr.rel (0) target = $region5
  $region4: #{lstm_classifier_forward.1} parent=0 // pred_region
    _
  $region5: #{lstm_classifier_forward.1} parent=0 // pred_fallthru
    _
  // Predicated region
  $region6: #{lstm_classifier_forward.1} parent=0 // pred_check
    _
  $region7: #{lstm_classifier_forward.1} parent=0 // pred_check_branch
    %12 = sbr.rel (0) target = $region9
  $region8: #{lstm_classifier_forward.1} parent=0 // pred_region
    _
  $region9: #{lstm_classifier_forward.1} parent=0 // pred_fallthru
    _
  // Predicated region
  $region10: #{lstm_classifier_forward.1} parent=0 // pred_check
    _
  $region11: #{lstm_classifier_forward.1} parent=0 // pred_check_branch
    %14 = sbr.rel (0) target = $region13
  $region12: #{lstm_classifier_forward.1} parent=0 // pred_region
    _
  $region13: #{lstm_classifier_forward.1} parent=0 // pred_fallthru
    _
  // Predicated region
  $region14: #{lstm_classifier_forward.1} parent=0 // pred_check
    _
  $region15: #{lstm_classifier_forward.1} parent=0 // pred_check_branch
    %16 = sbr.rel (0) target = $region17
  $region16: #{lstm_classifier_forward.1} parent=0 // pred_region
    _
  $region17: #{lstm_classifier_forward.1} parent=0 // pred_fallthru
    _
  %p18 = scmp.eq.s32.totalorder 0, 0
  // Predicated region
  $region18: #{lstm_classifier_forward.1} parent=0 // pred_check
    %p19 = pneg %p18
  $region19: #{lstm_classifier_forward.1} parent=0 // pred_check_branch
    %21 = sbr.rel (%p19) target = $region21
  $region20: #{lstm_classifier_forward.1} parent=0 // pred_region
    %22 = vst [vmem:[#allocation3] sm:$0xf] 0
    %23 = vst [vmem:[#allocation4] sm:$0xff] 0.0
  $region21: #{lstm_classifier_forward.1} parent=0 // pred_fallthru
    _
  %v24 = vld [vmem:[%s0] sm:$0xf]
  %v25 = vld [vmem:[%s0 + $0x4] sm:$0xf]
  %v26 = vld [vmem:[%s0 + $0x8] sm:$0xf]
  %v27 = vld [vmem:[%s0 + $0xc] sm:$0xf]
  %v28 = vld [vmem:[%s0 + $0x10] sm:$0xf]
  %v29 = vld [vmem:[%s0 + $0x14] sm:$0xf]
  %v30 = vld [vmem:[%s0 + $0x18] sm:$0xf]
  %v31 = vld [vmem:[%s0 + $0x1c] sm:$0xf]
  %v32 = vld [vmem:[%s1] sm:$0xff]
  %v33 = vld [vmem:[%s1 + $0x8] sm:$0xff]
  %v34 = vld [vmem:[%s1 + $0x10] sm:$0xff]
  %v35 = vld [vmem:[%s1 + $0x18] sm:$0xff]
  %v36 = vld [vmem:[%s1 + $0x20] sm:$0xff]
  %v37 = vld [vmem:[%s1 + $0x28] sm:$0xff]
  %v38 = vld [vmem:[%s1 + $0x30] sm:$0xff]
  %v39 = vld [vmem:[%s1 + $0x38] sm:$0xff]
  %v40 = vld [vmem:[%s1 + $0x40] sm:$0xff]
  %v41 = vld [vmem:[%s1 + $0x48] sm:$0xff]
  %v42 = vld [vmem:[%s1 + $0x50] sm:$0xff]
  %v43 = vld [vmem:[%s1 + $0x58] sm:$0xff]
  %v44 = vld [vmem:[%s1 + $0x60] sm:$0xff]
  %v45 = vld [vmem:[%s1 + $0x68] sm:$0xff]
  %v46 = vld [vmem:[%s1 + $0x70] sm:$0xff]
  %v47 = vld [vmem:[%s1 + $0x78] sm:$0xff]
  %v48 = vld [vmem:[%s1 + $0x80] sm:$0xff]
  %v49 = vld [vmem:[%s1 + $0x88] sm:$0xff]
  %v50 = vld [vmem:[%s1 + $0x90] sm:$0xff]
  %v51 = vld [vmem:[%s1 + $0x98] sm:$0xff]
  %v52 = vld [vmem:[%s1 + $0xa0] sm:$0xff]
  %v53 = vld [vmem:[%s1 + $0xa8] sm:$0xff]
  %v54 = vld [vmem:[%s1 + $0xb0] sm:$0xff]
  %v55 = vld [vmem:[%s1 + $0xb8] sm:$0xff]
  %v56 = vld [vmem:[%s1 + $0xc0] sm:$0xff]
  %v57 = vld [vmem:[%s1 + $0xc8] sm:$0xff]
  %v58 = vld [vmem:[%s1 + $0xd0] sm:$0xff]
  %v59 = vld [vmem:[%s1 + $0xd8] sm:$0xff]
  %v60 = vld [vmem:[%s1 + $0xe0] sm:$0xff]
  %v61 = vld [vmem:[%s1 + $0xe8] sm:$0xff]
  %v62 = vld [vmem:[%s1 + $0xf0] sm:$0xff]
  %v63 = vld [vmem:[%s1 + $0xf8] sm:$0xff]
  %v64 = vld [vmem:[%s3] sm:$0xf]
  %v66 = vlaneseq
  %v67 = vshrl.u32 %v66, 7
  %v68 = vsub.s32 0, %v67
  %v69 = vrot.slane %v64, %v68
  %v70 = vlaneseq
  %v71 = vshrl.u32 %v70, 7
  %v72 = vsub.s32 1, %v71
  %v73 = vrot.slane %v64, %v72
  %v74 = vlaneseq
  %v75 = vshrl.u32 %v74, 7
  %v76 = vsub.s32 2, %v75
  %v77 = vrot.slane %v64, %v76
  %v78 = vlaneseq
  %v79 = vshrl.u32 %v78, 7
  %v80 = vsub.s32 3, %v79
  %v81 = vrot.slane %v64, %v80
  %v94 = vunpack.c.l.b16 %v24
  %v95 = vunpack.c.l.b16 %v25
  %v96 = vunpack.c.l.b16 %v26
  %v97 = vunpack.c.l.b16 %v27
  %v98 = vunpack.c.l.b16 %v28
  %v99 = vunpack.c.l.b16 %v29
  %v100 = vunpack.c.l.b16 %v30
  %v101 = vunpack.c.l.b16 %v31
  %v102 = vpack.c.b16 %v95, %v94
  %v103 = vpack.c.b16 %v97, %v96
  %v104 = vpack.c.b16 %v99, %v98
  %v105 = vpack.c.b16 %v101, %v100
  %v142 = vunpack.c.l.b16 %v32
  %v143 = vunpack.c.h.b16 %v32
  %v144 = vunpack.c.l.b16 %v33
  %v145 = vunpack.c.h.b16 %v33
  %v146 = vunpack.c.l.b16 %v34
  %v147 = vunpack.c.h.b16 %v34
  %v148 = vunpack.c.l.b16 %v35
  %v149 = vunpack.c.h.b16 %v35
  %v150 = vunpack.c.l.b16 %v36
  %v151 = vunpack.c.h.b16 %v36
  %v152 = vunpack.c.l.b16 %v37
  %v153 = vunpack.c.h.b16 %v37
  %v154 = vunpack.c.l.b16 %v38
  %v155 = vunpack.c.h.b16 %v38
  %v156 = vunpack.c.l.b16 %v39
  %v157 = vunpack.c.h.b16 %v39
  %v158 = vunpack.c.l.b16 %v40
  %v159 = vunpack.c.h.b16 %v40
  %v160 = vunpack.c.l.b16 %v41
  %v161 = vunpack.c.h.b16 %v41
  %v162 = vunpack.c.l.b16 %v42
  %v163 = vunpack.c.h.b16 %v42
  %v164 = vunpack.c.l.b16 %v43
  %v165 = vunpack.c.h.b16 %v43
  %v166 = vunpack.c.l.b16 %v44
  %v167 = vunpack.c.h.b16 %v44
  %v168 = vunpack.c.l.b16 %v45
  %v169 = vunpack.c.h.b16 %v45
  %v170 = vunpack.c.l.b16 %v46
  %v171 = vunpack.c.h.b16 %v46
  %v172 = vunpack.c.l.b16 %v47
  %v173 = vunpack.c.h.b16 %v47
  %v174 = vunpack.c.l.b16 %v48
  %v175 = vunpack.c.h.b16 %v48
  %v176 = vunpack.c.l.b16 %v49
  %v177 = vunpack.c.h.b16 %v49
  %v178 = vunpack.c.l.b16 %v50
  %v179 = vunpack.c.h.b16 %v50
  %v180 = vunpack.c.l.b16 %v51
  %v181 = vunpack.c.h.b16 %v51
  %v182 = vunpack.c.l.b16 %v52
  %v183 = vunpack.c.h.b16 %v52
  %v184 = vunpack.c.l.b16 %v53
  %v185 = vunpack.c.h.b16 %v53
  %v186 = vunpack.c.l.b16 %v54
  %v187 = vunpack.c.h.b16 %v54
  %v188 = vunpack.c.l.b16 %v55
  %v189 = vunpack.c.h.b16 %v55
  %v190 = vunpack.c.l.b16 %v56
  %v191 = vunpack.c.h.b16 %v56
  %v192 = vunpack.c.l.b16 %v57
  %v193 = vunpack.c.h.b16 %v57
  %v194 = vunpack.c.l.b16 %v58
  %v195 = vunpack.c.h.b16 %v58
  %v196 = vunpack.c.l.b16 %v59
  %v197 = vunpack.c.h.b16 %v59
  %v198 = vunpack.c.l.b16 %v60
  %v199 = vunpack.c.h.b16 %v60
  %v200 = vunpack.c.l.b16 %v61
  %v201 = vunpack.c.h.b16 %v61
  %v202 = vunpack.c.l.b16 %v62
  %v203 = vunpack.c.h.b16 %v62
  %v204 = vunpack.c.l.b16 %v63
  %v205 = vunpack.c.h.b16 %v63
  %v206 = vpack.c.b16 %v146, %v142
  %v207 = vpack.c.b16 %v147, %v143
  %v208 = vpack.c.b16 %v148, %v144
  %v209 = vpack.c.b16 %v149, %v145
  %v210 = vpack.c.b16 %v154, %v150
  %v211 = vpack.c.b16 %v155, %v151
  %v212 = vpack.c.b16 %v156, %v152
  %v213 = vpack.c.b16 %v157, %v153
  %v214 = vpack.c.b16 %v162, %v158
  %v215 = vpack.c.b16 %v163, %v159
  %v216 = vpack.c.b16 %v164, %v160
  %v217 = vpack.c.b16 %v165, %v161
  %v218 = vpack.c.b16 %v170, %v166
  %v219 = vpack.c.b16 %v171, %v167
  %v220 = vpack.c.b16 %v172, %v168
  %v221 = vpack.c.b16 %v173, %v169
  %v222 = vpack.c.b16 %v178, %v174
  %v223 = vpack.c.b16 %v179, %v175
  %v224 = vpack.c.b16 %v180, %v176
  %v225 = vpack.c.b16 %v181, %v177
  %v226 = vpack.c.b16 %v186, %v182
  %v227 = vpack.c.b16 %v187, %v183
  %v228 = vpack.c.b16 %v188, %v184
  %v229 = vpack.c.b16 %v189, %v185
  %v230 = vpack.c.b16 %v194, %v190
  %v231 = vpack.c.b16 %v195, %v191
  %v232 = vpack.c.b16 %v196, %v192
  %v233 = vpack.c.b16 %v197, %v193
  %v234 = vpack.c.b16 %v202, %v198
  %v235 = vpack.c.b16 %v203, %v199
  %v236 = vpack.c.b16 %v204, %v200
  %v237 = vpack.c.b16 %v205, %v201
  %270 = vmatprep.subr.bf16.mxu0 %v235
  %271 = vmatpush1.bf16.msra.mxu0 %v234
  %272 = vmatprep.subr.bf16.mxu0 %v231
  %273 = vmatpush1.bf16.msra.mxu0 %v230
  %274 = vmatprep.subr.bf16.mxu0 %v227
  %275 = vmatpush1.bf16.msra.mxu0 %v226
  %276 = vmatprep.subr.bf16.mxu0 %v223
  %277 = vmatpush1.bf16.msra.mxu0 %v222
  %278 = vmatprep.subr.bf16.mxu0 %v219
  %279 = vmatpush1.bf16.msra.mxu0 %v218
  %280 = vmatprep.subr.bf16.mxu0 %v215
  %281 = vmatpush1.bf16.msra.mxu0 %v214
  %282 = vmatprep.subr.bf16.mxu0 %v211
  %283 = vmatpush1.bf16.msra.mxu0 %v210
  %284 = vmatprep.subr.bf16.mxu0 %v207
  %285 = vmatpush1.bf16.msra.mxu0 %v206
  %286 = vmatprep.subr.bf16.mxu0 0
  %287 = vmatpush2.bf16.msra.mxu0 0
  %288 = vmatprep.subr.bf16.mxu0 0
  %289 = vmatpush2.bf16.msra.mxu0 0
  %290 = vmatprep.subr.bf16.mxu0 0
  %291 = vmatpush2.bf16.msra.mxu0 0
  %292 = vmatprep.subr.bf16.mxu0 0
  %293 = vmatpush2.bf16.msra.mxu0 0
  %294 = vmatprep.subr.bf16.mxu0 0
  %295 = vmatpush2.bf16.msra.mxu0 0
  %296 = vmatprep.subr.bf16.mxu0 0
  %297 = vmatpush2.bf16.msra.mxu0 0
  %298 = vmatprep.subr.bf16.mxu0 0
  %299 = vmatpush2.bf16.msra.mxu0 0
  %300 = vmatprep.subr.bf16.mxu0 0
  %301 = vmatpush2.bf16.msra.mxu0 0
  %302 = vmatprep.mubr.bf16.mxu0 0
  %303 = vmatmul.mubr.bf16.gmra.mxu0 %v102
  %v304 = vpop.f32.mrf.mxu0
  %v305 = vadd.f32 %v69, %v304
  %v306 = vpop.f32.mrf.mxu0
  %v307 = vadd.f32 %v73, %v306
  %v308 = vpop.f32.mrf.mxu0
  %v309 = vadd.f32 %v69, %v308
  %v310 = vpop.f32.mrf.mxu0
  %v311 = vadd.f32 %v73, %v310
  %312 = vmatprep.mubr.bf16.mxu0 0
  %313 = vmatmul.mubr.bf16.gmra.mxu0 %v103
  %v314 = vpop.f32.mrf.mxu0
  %v315 = vadd.f32 %v69, %v314
  %v316 = vpop.f32.mrf.mxu0
  %v317 = vadd.f32 %v73, %v316
  %v318 = vpop.f32.mrf.mxu0
  %v319 = vadd.f32 %v69, %v318
  %v320 = vpop.f32.mrf.mxu0
  %v321 = vadd.f32 %v73, %v320
  %322 = vmatprep.mubr.bf16.mxu0 0
  %323 = vmatmul.mubr.bf16.gmra.mxu0 %v104
  %v324 = vpop.f32.mrf.mxu0
  %v325 = vadd.f32 %v69, %v324
  %v326 = vpop.f32.mrf.mxu0
  %v327 = vadd.f32 %v73, %v326
  %v328 = vpop.f32.mrf.mxu0
  %v329 = vadd.f32 %v69, %v328
  %v330 = vpop.f32.mrf.mxu0
  %v331 = vadd.f32 %v73, %v330
  %332 = vmatprep.mubr.bf16.mxu0 0
  %333 = vmatmul.mubr.bf16.gmra.mxu0 %v105
  %v334 = vpop.f32.mrf.mxu0
  %v335 = vadd.f32 %v69, %v334
  %v336 = vpop.f32.mrf.mxu0
  %v337 = vadd.f32 %v73, %v336
  %v338 = vpop.f32.mrf.mxu0
  %v339 = vadd.f32 %v69, %v338
  %v340 = vpop.f32.mrf.mxu0
  %v341 = vadd.f32 %v73, %v340
  %342 = vdwg.mxu0
  %343 = vmatprep.subr.bf16.mxu0 %v237
  %344 = vmatpush1.bf16.msra.mxu0 %v236
  %345 = vmatprep.subr.bf16.mxu0 %v233
  %346 = vmatpush1.bf16.msra.mxu0 %v232
  %347 = vmatprep.subr.bf16.mxu0 %v229
  %348 = vmatpush1.bf16.msra.mxu0 %v228
  %349 = vmatprep.subr.bf16.mxu0 %v225
  %350 = vmatpush1.bf16.msra.mxu0 %v224
  %351 = vmatprep.subr.bf16.mxu0 %v221
  %352 = vmatpush1.bf16.msra.mxu0 %v220
  %353 = vmatprep.subr.bf16.mxu0 %v217
  %354 = vmatpush1.bf16.msra.mxu0 %v216
  %355 = vmatprep.subr.bf16.mxu0 %v213
  %356 = vmatpush1.bf16.msra.mxu0 %v212
  %357 = vmatprep.subr.bf16.mxu0 %v209
  %358 = vmatpush1.bf16.msra.mxu0 %v208
  %359 = vmatprep.subr.bf16.mxu0 0
  %360 = vmatpush2.bf16.msra.mxu0 0
  %361 = vmatprep.subr.bf16.mxu0 0
  %362 = vmatpush2.bf16.msra.mxu0 0
  %363 = vmatprep.subr.bf16.mxu0 0
  %364 = vmatpush2.bf16.msra.mxu0 0
  %365 = vmatprep.subr.bf16.mxu0 0
  %366 = vmatpush2.bf16.msra.mxu0 0
  %367 = vmatprep.subr.bf16.mxu0 0
  %368 = vmatpush2.bf16.msra.mxu0 0
  %369 = vmatprep.subr.bf16.mxu0 0
  %370 = vmatpush2.bf16.msra.mxu0 0
  %371 = vmatprep.subr.bf16.mxu0 0
  %372 = vmatpush2.bf16.msra.mxu0 0
  %373 = vmatprep.subr.bf16.mxu0 0
  %374 = vmatpush2.bf16.msra.mxu0 0
  %375 = vmatprep.mubr.bf16.mxu0 0
  %376 = vmatmul.mubr.bf16.gmra.mxu0 %v102
  %v377 = vpop.f32.mrf.mxu0
  %v378 = vadd.f32 %v77, %v377
  %v379 = vpop.f32.mrf.mxu0
  %v380 = vadd.f32 %v81, %v379
  %v381 = vpop.f32.mrf.mxu0
  %v382 = vadd.f32 %v77, %v381
  %v383 = vpop.f32.mrf.mxu0
  %v384 = vadd.f32 %v81, %v383
  %385 = vmatprep.mubr.bf16.mxu0 0
  %386 = vmatmul.mubr.bf16.gmra.mxu0 %v103
  %v387 = vpop.f32.mrf.mxu0
  %v388 = vadd.f32 %v77, %v387
  %v389 = vpop.f32.mrf.mxu0
  %v390 = vadd.f32 %v81, %v389
  %v391 = vpop.f32.mrf.mxu0
  %v392 = vadd.f32 %v77, %v391
  %v393 = vpop.f32.mrf.mxu0
  %v394 = vadd.f32 %v81, %v393
  %395 = vmatprep.mubr.bf16.mxu0 0
  %396 = vmatmul.mubr.bf16.gmra.mxu0 %v104
  %v397 = vpop.f32.mrf.mxu0
  %v398 = vadd.f32 %v77, %v397
  %v399 = vpop.f32.mrf.mxu0
  %v400 = vadd.f32 %v81, %v399
  %v401 = vpop.f32.mrf.mxu0
  %v402 = vadd.f32 %v77, %v401
  %v403 = vpop.f32.mrf.mxu0
  %v404 = vadd.f32 %v81, %v403
  %405 = vmatprep.mubr.bf16.mxu0 0
  %406 = vmatmul.mubr.bf16.gmra.mxu0 %v105
  %v407 = vpop.f32.mrf.mxu0
  %v408 = vadd.f32 %v77, %v407
  %v409 = vpop.f32.mrf.mxu0
  %v410 = vadd.f32 %v81, %v409
  %v411 = vpop.f32.mrf.mxu0
  %v412 = vadd.f32 %v77, %v411
  %v413 = vpop.f32.mrf.mxu0
  %v414 = vadd.f32 %v81, %v413
  %415 = vdwg.mxu0
  %416 = vst [vmem:[#allocation2] sm:$0xff] %v305
  %417 = vst [vmem:[#allocation2 + $0x8] sm:$0xff] %v307
  %418 = vst [vmem:[#allocation2 + $0x10] sm:$0xff] %v378
  %419 = vst [vmem:[#allocation2 + $0x18] sm:$0xff] %v380
  %420 = vst [vmem:[#allocation2 + $0x20] sm:$0xff] %v309
  %421 = vst [vmem:[#allocation2 + $0x28] sm:$0xff] %v311
  %422 = vst [vmem:[#allocation2 + $0x30] sm:$0xff] %v382
  %423 = vst [vmem:[#allocation2 + $0x38] sm:$0xff] %v384
  %424 = vst [vmem:[#allocation2 + $0x40] sm:$0xff] %v315
  %425 = vst [vmem:[#allocation2 + $0x48] sm:$0xff] %v317
  %426 = vst [vmem:[#allocation2 + $0x50] sm:$0xff] %v388
  %427 = vst [vmem:[#allocation2 + $0x58] sm:$0xff] %v390
  %428 = vst [vmem:[#allocation2 + $0x60] sm:$0xff] %v319
  %429 = vst [vmem:[#allocation2 + $0x68] sm:$0xff] %v321
  %430 = vst [vmem:[#allocation2 + $0x70] sm:$0xff] %v392
  %431 = vst [vmem:[#allocation2 + $0x78] sm:$0xff] %v394
  %432 = vst [vmem:[#allocation2 + $0x80] sm:$0xff] %v325
  %433 = vst [vmem:[#allocation2 + $0x88] sm:$0xff] %v327
  %434 = vst [vmem:[#allocation2 + $0x90] sm:$0xff] %v398
  %435 = vst [vmem:[#allocation2 + $0x98] sm:$0xff] %v400
  %436 = vst [vmem:[#allocation2 + $0xa0] sm:$0xff] %v329
  %437 = vst [vmem:[#allocation2 + $0xa8] sm:$0xff] %v331
  %438 = vst [vmem:[#allocation2 + $0xb0] sm:$0xff] %v402
  %439 = vst [vmem:[#allocation2 + $0xb8] sm:$0xff] %v404
  %440 = vst [vmem:[#allocation2 + $0xc0] sm:$0xff] %v335
  %441 = vst [vmem:[#allocation2 + $0xc8] sm:$0xff] %v337
  %442 = vst [vmem:[#allocation2 + $0xd0] sm:$0xff] %v408
  %443 = vst [vmem:[#allocation2 + $0xd8] sm:$0xff] %v410
  %444 = vst [vmem:[#allocation2 + $0xe0] sm:$0xff] %v339
  %445 = vst [vmem:[#allocation2 + $0xe8] sm:$0xff] %v341
  %446 = vst [vmem:[#allocation2 + $0xf0] sm:$0xff] %v412
  %447 = vst [vmem:[#allocation2 + $0xf8] sm:$0xff] %v414
  %v448 = vld [vmem:[%s2] sm:$0xff]
  %v449 = vld [vmem:[%s2 + $0x8] sm:$0xff]
  %v450 = vld [vmem:[%s2 + $0x10] sm:$0xff]
  %v451 = vld [vmem:[%s2 + $0x18] sm:$0xff]
  %v452 = vld [vmem:[%s2 + $0x20] sm:$0xff]
  %v453 = vld [vmem:[%s2 + $0x28] sm:$0xff]
  %v454 = vld [vmem:[%s2 + $0x30] sm:$0xff]
  %v455 = vld [vmem:[%s2 + $0x38] sm:$0xff]
  %v456 = vld [vmem:[%s2 + $0x40] sm:$0xff]
  %v457 = vld [vmem:[%s2 + $0x48] sm:$0xff]
  %v458 = vld [vmem:[%s2 + $0x50] sm:$0xff]
  %v459 = vld [vmem:[%s2 + $0x58] sm:$0xff]
  %v460 = vld [vmem:[%s2 + $0x60] sm:$0xff]
  %v461 = vld [vmem:[%s2 + $0x68] sm:$0xff]
  %v462 = vld [vmem:[%s2 + $0x70] sm:$0xff]
  %v463 = vld [vmem:[%s2 + $0x78] sm:$0xff]
  %v464 = vld [vmem:[%s2 + $0x80] sm:$0xff]
  %v465 = vld [vmem:[%s2 + $0x88] sm:$0xff]
  %v466 = vld [vmem:[%s2 + $0x90] sm:$0xff]
  %v467 = vld [vmem:[%s2 + $0x98] sm:$0xff]
  %v468 = vld [vmem:[%s2 + $0xa0] sm:$0xff]
  %v469 = vld [vmem:[%s2 + $0xa8] sm:$0xff]
  %v470 = vld [vmem:[%s2 + $0xb0] sm:$0xff]
  %v471 = vld [vmem:[%s2 + $0xb8] sm:$0xff]
  %v472 = vld [vmem:[%s2 + $0xc0] sm:$0xff]
  %v473 = vld [vmem:[%s2 + $0xc8] sm:$0xff]
  %v474 = vld [vmem:[%s2 + $0xd0] sm:$0xff]
  %v475 = vld [vmem:[%s2 + $0xd8] sm:$0xff]
  %v476 = vld [vmem:[%s2 + $0xe0] sm:$0xff]
  %v477 = vld [vmem:[%s2 + $0xe8] sm:$0xff]
  %v478 = vld [vmem:[%s2 + $0xf0] sm:$0xff]
  %v479 = vld [vmem:[%s2 + $0xf8] sm:$0xff]
  %v480 = vld [vmem:[#allocation3] sm:$0xf]
  %v481 = vld [vmem:[#allocation4] sm:$0xff]
  %v482 = vld [vmem:[#allocation2] sm:$0xff]
  %v483 = vld [vmem:[#allocation2 + $0x8] sm:$0xff]
  %v484 = vld [vmem:[#allocation2 + $0x10] sm:$0xff]
  %v485 = vld [vmem:[#allocation2 + $0x18] sm:$0xff]
  %v518 = vunpack.c.l.b16 %v448
  %v519 = vunpack.c.h.b16 %v448
  %v520 = vunpack.c.l.b16 %v449
  %v521 = vunpack.c.h.b16 %v449
  %v522 = vunpack.c.l.b16 %v450
  %v523 = vunpack.c.h.b16 %v450
  %v524 = vunpack.c.l.b16 %v451
  %v525 = vunpack.c.h.b16 %v451
  %v526 = vunpack.c.l.b16 %v452
  %v527 = vunpack.c.h.b16 %v452
  %v528 = vunpack.c.l.b16 %v453
  %v529 = vunpack.c.h.b16 %v453
  %v530 = vunpack.c.l.b16 %v454
  %v531 = vunpack.c.h.b16 %v454
  %v532 = vunpack.c.l.b16 %v455
  %v533 = vunpack.c.h.b16 %v455
  %v534 = vunpack.c.l.b16 %v456
  %v535 = vunpack.c.h.b16 %v456
  %v536 = vunpack.c.l.b16 %v457
  %v537 = vunpack.c.h.b16 %v457
  %v538 = vunpack.c.l.b16 %v458
  %v539 = vunpack.c.h.b16 %v458
  %v540 = vunpack.c.l.b16 %v459
  %v541 = vunpack.c.h.b16 %v459
  %v542 = vunpack.c.l.b16 %v460
  %v543 = vunpack.c.h.b16 %v460
  %v544 = vunpack.c.l.b16 %v461
  %v545 = vunpack.c.h.b16 %v461
  %v546 = vunpack.c.l.b16 %v462
  %v547 = vunpack.c.h.b16 %v462
  %v548 = vunpack.c.l.b16 %v463
  %v549 = vunpack.c.h.b16 %v463
  %v550 = vunpack.c.l.b16 %v464
  %v551 = vunpack.c.h.b16 %v464
  %v552 = vunpack.c.l.b16 %v465
  %v553 = vunpack.c.h.b16 %v465
  %v554 = vunpack.c.l.b16 %v466
  %v555 = vunpack.c.h.b16 %v466
  %v556 = vunpack.c.l.b16 %v467
  %v557 = vunpack.c.h.b16 %v467
  %v558 = vunpack.c.l.b16 %v468
  %v559 = vunpack.c.h.b16 %v468
  %v560 = vunpack.c.l.b16 %v469
  %v561 = vunpack.c.h.b16 %v469
  %v562 = vunpack.c.l.b16 %v470
  %v563 = vunpack.c.h.b16 %v470
  %v564 = vunpack.c.l.b16 %v471
  %v565 = vunpack.c.h.b16 %v471
  %v566 = vunpack.c.l.b16 %v472
  %v567 = vunpack.c.h.b16 %v472
  %v568 = vunpack.c.l.b16 %v473
  %v569 = vunpack.c.h.b16 %v473
  %v570 = vunpack.c.l.b16 %v474
  %v571 = vunpack.c.h.b16 %v474
  %v572 = vunpack.c.l.b16 %v475
  %v573 = vunpack.c.h.b16 %v475
  %v574 = vunpack.c.l.b16 %v476
  %v575 = vunpack.c.h.b16 %v476
  %v576 = vunpack.c.l.b16 %v477
  %v577 = vunpack.c.h.b16 %v477
  %v578 = vunpack.c.l.b16 %v478
  %v579 = vunpack.c.h.b16 %v478
  %v580 = vunpack.c.l.b16 %v479
  %v581 = vunpack.c.h.b16 %v479
  %v582 = vpack.c.b16 %v522, %v518
  %v583 = vpack.c.b16 %v523, %v519
  %v584 = vpack.c.b16 %v524, %v520
  %v585 = vpack.c.b16 %v525, %v521
  %v586 = vpack.c.b16 %v530, %v526
  %v587 = vpack.c.b16 %v531, %v527
  %v588 = vpack.c.b16 %v532, %v528
  %v589 = vpack.c.b16 %v533, %v529
  %v590 = vpack.c.b16 %v538, %v534
  %v591 = vpack.c.b16 %v539, %v535
  %v592 = vpack.c.b16 %v540, %v536
  %v593 = vpack.c.b16 %v541, %v537
  %v594 = vpack.c.b16 %v546, %v542
  %v595 = vpack.c.b16 %v547, %v543
  %v596 = vpack.c.b16 %v548, %v544
  %v597 = vpack.c.b16 %v549, %v545
  %v598 = vpack.c.b16 %v554, %v550
  %v599 = vpack.c.b16 %v555, %v551
  %v600 = vpack.c.b16 %v556, %v552
  %v601 = vpack.c.b16 %v557, %v553
  %v602 = vpack.c.b16 %v562, %v558
  %v603 = vpack.c.b16 %v563, %v559
  %v604 = vpack.c.b16 %v564, %v560
  %v605 = vpack.c.b16 %v565, %v561
  %v606 = vpack.c.b16 %v570, %v566
  %v607 = vpack.c.b16 %v571, %v567
  %v608 = vpack.c.b16 %v572, %v568
  %v609 = vpack.c.b16 %v573, %v569
  %v610 = vpack.c.b16 %v578, %v574
  %v611 = vpack.c.b16 %v579, %v575
  %v612 = vpack.c.b16 %v580, %v576
  %v613 = vpack.c.b16 %v581, %v577
  %646 = vmatprep.subr.bf16.mxu0 %v611
  %647 = vmatpush1.bf16.msra.mxu0 %v610
  %648 = vmatprep.subr.bf16.mxu0 %v607
  %649 = vmatpush1.bf16.msra.mxu0 %v606
  %650 = vmatprep.subr.bf16.mxu0 %v603
  %651 = vmatpush1.bf16.msra.mxu0 %v602
  %652 = vmatprep.subr.bf16.mxu0 %v599
  %653 = vmatpush1.bf16.msra.mxu0 %v598
  %654 = vmatprep.subr.bf16.mxu0 %v595
  %655 = vmatpush1.bf16.msra.mxu0 %v594
  %656 = vmatprep.subr.bf16.mxu0 %v591
  %657 = vmatpush1.bf16.msra.mxu0 %v590
  %658 = vmatprep.subr.bf16.mxu0 %v587
  %659 = vmatpush1.bf16.msra.mxu0 %v586
  %660 = vmatprep.subr.bf16.mxu0 %v583
  %661 = vmatpush1.bf16.msra.mxu0 %v582
  %662 = vmatprep.subr.bf16.mxu0 0
  %663 = vmatpush2.bf16.msra.mxu0 0
  %664 = vmatprep.subr.bf16.mxu0 0
  %665 = vmatpush2.bf16.msra.mxu0 0
  %666 = vmatprep.subr.bf16.mxu0 0
  %667 = vmatpush2.bf16.msra.mxu0 0
  %668 = vmatprep.subr.bf16.mxu0 0
  %669 = vmatpush2.bf16.msra.mxu0 0
  %670 = vmatprep.subr.bf16.mxu0 0
  %671 = vmatpush2.bf16.msra.mxu0 0
  %672 = vmatprep.subr.bf16.mxu0 0
  %673 = vmatpush2.bf16.msra.mxu0 0
  %674 = vmatprep.subr.bf16.mxu0 0
  %675 = vmatpush2.bf16.msra.mxu0 0
  %676 = vmatprep.subr.bf16.mxu0 0
  %677 = vmatpush2.bf16.msra.mxu0 0
  %678 = vmatprep.mubr.bf16.mxu0 0
  %679 = vmatmul.mubr.bf16.gmra.mxu0 %v480
  %v680 = vpop.f32.mrf.mxu0
  %v681 = vadd.f32 0.0, %v680
  %v682 = vpop.f32.mrf.mxu0
  %v683 = vadd.f32 0.0, %v682
  %v684 = vpop.f32.mrf.mxu0
  %v685 = vpop.f32.mrf.mxu0
  %686 = vdwg.mxu0
  %687 = vmatprep.subr.bf16.mxu0 %v613
  %688 = vmatpush1.bf16.msra.mxu0 %v612
  %689 = vmatprep.subr.bf16.mxu0 %v609
  %690 = vmatpush1.bf16.msra.mxu0 %v608
  %691 = vmatprep.subr.bf16.mxu0 %v605
  %692 = vmatpush1.bf16.msra.mxu0 %v604
  %693 = vmatprep.subr.bf16.mxu0 %v601
  %694 = vmatpush1.bf16.msra.mxu0 %v600
  %695 = vmatprep.subr.bf16.mxu0 %v597
  %696 = vmatpush1.bf16.msra.mxu0 %v596
  %697 = vmatprep.subr.bf16.mxu0 %v593
  %698 = vmatpush1.bf16.msra.mxu0 %v592
  %699 = vmatprep.subr.bf16.mxu0 %v589
  %700 = vmatpush1.bf16.msra.mxu0 %v588
  %701 = vmatprep.subr.bf16.mxu0 %v585
  %702 = vmatpush1.bf16.msra.mxu0 %v584
  %703 = vmatprep.subr.bf16.mxu0 0
  %704 = vmatpush2.bf16.msra.mxu0 0
  %705 = vmatprep.subr.bf16.mxu0 0
  %706 = vmatpush2.bf16.msra.mxu0 0
  %707 = vmatprep.subr.bf16.mxu0 0
  %708 = vmatpush2.bf16.msra.mxu0 0
  %709 = vmatprep.subr.bf16.mxu0 0
  %710 = vmatpush2.bf16.msra.mxu0 0
  %711 = vmatprep.subr.bf16.mxu0 0
  %712 = vmatpush2.bf16.msra.mxu0 0
  %713 = vmatprep.subr.bf16.mxu0 0
  %714 = vmatpush2.bf16.msra.mxu0 0
  %715 = vmatprep.subr.bf16.mxu0 0
  %716 = vmatpush2.bf16.msra.mxu0 0
  %717 = vmatprep.subr.bf16.mxu0 0
  %718 = vmatpush2.bf16.msra.mxu0 0
  %719 = vmatprep.mubr.bf16.mxu0 0
  %720 = vmatmul.mubr.bf16.gmra.mxu0 %v480
  %v721 = vpop.f32.mrf.mxu0
  %v722 = vadd.f32 0.0, %v721
  %v723 = vpop.f32.mrf.mxu0
  %v724 = vadd.f32 0.0, %v723
  %v725 = vpop.f32.mrf.mxu0
  %v726 = vpop.f32.mrf.mxu0
  %727 = vdwg.mxu0
  %v728 = vadd.f32 %v482, %v681
  %v729 = vadd.f32 %v483, %v683
  %v730 = vadd.f32 %v484, %v722
  %v731 = vadd.f32 %v485, %v724
  %v732 = vxor.u32 %v728, 2147483648
  %v733 = vmul.f32 %v732, 1.442695
  %v734 = vpow.pop %v733
  %v735 = vadd.f32 %v734, 1.0
  %v736 = vrcp.pop %v735
  %v737 = vmul.f32 1.0, %v736
  %v738 = vxor.u32 %v729, 2147483648
  %v739 = vmul.f32 %v738, 1.442695
  %v740 = vpow.pop %v739
  %v741 = vadd.f32 %v740, 1.0
  %v742 = vrcp.pop %v741
  %v743 = vmul.f32 1.0, %v742
  %v744 = vtanh.pop %v730
  %v745 = vxor.u32 %v731, 2147483648
  %v746 = vmul.f32 %v745, 1.442695
  %v747 = vpow.pop %v746
  %v748 = vadd.f32 %v747, 1.0
  %v749 = vrcp.pop %v748
  %v750 = vmul.f32 1.0, %v749
  %v751 = vmul.f32 %v743, %v481
  %v752 = vmul.f32 %v737, %v744
  %v753 = vadd.f32 %v751, %v752
  %v754 = vtanh.pop %v753
  %v755 = vmul.f32 %v750, %v754
  %v756 = vpack.c.bf16 %v755, %v755
  %s757 = scalar_lea.vmem [#allocation2], 32
  %v758 = vld [vmem:[%s757] sm:$0xff]
  %v759 = vld [vmem:[%s757 + $0x8] sm:$0xff]
  %v760 = vld [vmem:[%s757 + $0x10] sm:$0xff]
  %v761 = vld [vmem:[%s757 + $0x18] sm:$0xff]
  %762 = vmatprep.subr.bf16.mxu0 %v611
  %763 = vmatpush1.bf16.msra.mxu0 %v610
  %764 = vmatprep.subr.bf16.mxu0 %v607
  %765 = vmatpush1.bf16.msra.mxu0 %v606
  %766 = vmatprep.subr.bf16.mxu0 %v603
  %767 = vmatpush1.bf16.msra.mxu0 %v602
  %768 = vmatprep.subr.bf16.mxu0 %v599
  %769 = vmatpush1.bf16.msra.mxu0 %v598
  %770 = vmatprep.subr.bf16.mxu0 %v595
  %771 = vmatpush1.bf16.msra.mxu0 %v594
  %772 = vmatprep.subr.bf16.mxu0 %v591
  %773 = vmatpush1.bf16.msra.mxu0 %v590
  %774 = vmatprep.subr.bf16.mxu0 %v587
  %775 = vmatpush1.bf16.msra.mxu0 %v586
  %776 = vmatprep.subr.bf16.mxu0 %v583
  %777 = vmatpush1.bf16.msra.mxu0 %v582
  %778 = vmatprep.subr.bf16.mxu0 0
  %779 = vmatpush2.bf16.msra.mxu0 0
  %780 = vmatprep.subr.bf16.mxu0 0
  %781 = vmatpush2.bf16.msra.mxu0 0
  %782 = vmatprep.subr.bf16.mxu0 0
  %783 = vmatpush2.bf16.msra.mxu0 0
  %784 = vmatprep.subr.bf16.mxu0 0
  %785 = vmatpush2.bf16.msra.mxu0 0
  %786 = vmatprep.subr.bf16.mxu0 0
  %787 = vmatpush2.bf16.msra.mxu0 0
  %788 = vmatprep.subr.bf16.mxu0 0
  %789 = vmatpush2.bf16.msra.mxu0 0
  %790 = vmatprep.subr.bf16.mxu0 0
  %791 = vmatpush2.bf16.msra.mxu0 0
  %792 = vmatprep.subr.bf16.mxu0 0
  %793 = vmatpush2.bf16.msra.mxu0 0
  %794 = vmatprep.mubr.bf16.mxu0 0
  %795 = vmatmul.mubr.bf16.gmra.mxu0 %v756
  %v796 = vpop.f32.mrf.mxu0
  %v797 = vadd.f32 0.0, %v796
  %v798 = vpop.f32.mrf.mxu0
  %v799 = vadd.f32 0.0, %v798
  %v800 = vpop.f32.mrf.mxu0
  %v801 = vpop.f32.mrf.mxu0
  %802 = vdwg.mxu0
  %803 = vmatprep.subr.bf16.mxu0 %v613
  %804 = vmatpush1.bf16.msra.mxu0 %v612
  %805 = vmatprep.subr.bf16.mxu0 %v609
  %806 = vmatpush1.bf16.msra.mxu0 %v608
  %807 = vmatprep.subr.bf16.mxu0 %v605
  %808 = vmatpush1.bf16.msra.mxu0 %v604
  %809 = vmatprep.subr.bf16.mxu0 %v601
  %810 = vmatpush1.bf16.msra.mxu0 %v600
  %811 = vmatprep.subr.bf16.mxu0 %v597
  %812 = vmatpush1.bf16.msra.mxu0 %v596
  %813 = vmatprep.subr.bf16.mxu0 %v593
  %814 = vmatpush1.bf16.msra.mxu0 %v592
  %815 = vmatprep.subr.bf16.mxu0 %v589
  %816 = vmatpush1.bf16.msra.mxu0 %v588
  %817 = vmatprep.subr.bf16.mxu0 %v585
  %818 = vmatpush1.bf16.msra.mxu0 %v584
  %819 = vmatprep.subr.bf16.mxu0 0
  %820 = vmatpush2.bf16.msra.mxu0 0
  %821 = vmatprep.subr.bf16.mxu0 0
  %822 = vmatpush2.bf16.msra.mxu0 0
  %823 = vmatprep.subr.bf16.mxu0 0
  %824 = vmatpush2.bf16.msra.mxu0 0
  %825 = vmatprep.subr.bf16.mxu0 0
  %826 = vmatpush2.bf16.msra.mxu0 0
  %827 = vmatprep.subr.bf16.mxu0 0
  %828 = vmatpush2.bf16.msra.mxu0 0
  %829 = vmatprep.subr.bf16.mxu0 0
  %830 = vmatpush2.bf16.msra.mxu0 0
  %831 = vmatprep.subr.bf16.mxu0 0
  %832 = vmatpush2.bf16.msra.mxu0 0
  %833 = vmatprep.subr.bf16.mxu0 0
  %834 = vmatpush2.bf16.msra.mxu0 0
  %835 = vmatprep.mubr.bf16.mxu0 0
  %836 = vmatmul.mubr.bf16.gmra.mxu0 %v756
  %v837 = vpop.f32.mrf.mxu0
  %v838 = vadd.f32 0.0, %v837
  %v839 = vpop.f32.mrf.mxu0
  %v840 = vadd.f32 0.0, %v839
  %v841 = vpop.f32.mrf.mxu0
  %v842 = vpop.f32.mrf.mxu0
  %843 = vdwg.mxu0
  %v844 = vadd.f32 %v758, %v797
  %v845 = vadd.f32 %v759, %v799
  %v846 = vadd.f32 %v760, %v838
  %v847 = vadd.f32 %v761, %v840
  %v848 = vxor.u32 %v844, 2147483648
  %v849 = vmul.f32 %v848, 1.442695
  %v850 = vpow.pop %v849
  %v851 = vadd.f32 %v850, 1.0
  %v852 = vrcp.pop %v851
  %v853 = vmul.f32 1.0, %v852
  %v854 = vxor.u32 %v845, 2147483648
  %v855 = vmul.f32 %v854, 1.442695
  %v856 = vpow.pop %v855
  %v857 = vadd.f32 %v856, 1.0
  %v858 = vrcp.pop %v857
  %v859 = vmul.f32 1.0, %v858
  %v860 = vtanh.pop %v846
  %v861 = vxor.u32 %v847, 2147483648
  %v862 = vmul.f32 %v861, 1.442695
  %v863 = vpow.pop %v862
  %v864 = vadd.f32 %v863, 1.0
  %v865 = vrcp.pop %v864
  %v866 = vmul.f32 1.0, %v865
  %v867 = vmul.f32 %v859, %v753
  %v868 = vmul.f32 %v853, %v860
  %v869 = vadd.f32 %v867, %v868
  %v870 = vtanh.pop %v869
  %v871 = vmul.f32 %v866, %v870
  %v872 = vpack.c.bf16 %v871, %v871
  %s873 = scalar_lea.vmem [#allocation2], 64
  %v874 = vld [vmem:[%s873] sm:$0xff]
  %v875 = vld [vmem:[%s873 + $0x8] sm:$0xff]
  %v876 = vld [vmem:[%s873 + $0x10] sm:$0xff]
  %v877 = vld [vmem:[%s873 + $0x18] sm:$0xff]
  %878 = vmatprep.subr.bf16.mxu0 %v611
  %879 = vmatpush1.bf16.msra.mxu0 %v610
  %880 = vmatprep.subr.bf16.mxu0 %v607
  %881 = vmatpush1.bf16.msra.mxu0 %v606
  %882 = vmatprep.subr.bf16.mxu0 %v603
  %883 = vmatpush1.bf16.msra.mxu0 %v602
  %884 = vmatprep.subr.bf16.mxu0 %v599
  %885 = vmatpush1.bf16.msra.mxu0 %v598
  %886 = vmatprep.subr.bf16.mxu0 %v595
  %887 = vmatpush1.bf16.msra.mxu0 %v594
  %888 = vmatprep.subr.bf16.mxu0 %v591
  %889 = vmatpush1.bf16.msra.mxu0 %v590
  %890 = vmatprep.subr.bf16.mxu0 %v587
  %891 = vmatpush1.bf16.msra.mxu0 %v586
  %892 = vmatprep.subr.bf16.mxu0 %v583
  %893 = vmatpush1.bf16.msra.mxu0 %v582
  %894 = vmatprep.subr.bf16.mxu0 0
  %895 = vmatpush2.bf16.msra.mxu0 0
  %896 = vmatprep.subr.bf16.mxu0 0
  %897 = vmatpush2.bf16.msra.mxu0 0
  %898 = vmatprep.subr.bf16.mxu0 0
  %899 = vmatpush2.bf16.msra.mxu0 0
  %900 = vmatprep.subr.bf16.mxu0 0
  %901 = vmatpush2.bf16.msra.mxu0 0
  %902 = vmatprep.subr.bf16.mxu0 0
  %903 = vmatpush2.bf16.msra.mxu0 0
  %904 = vmatprep.subr.bf16.mxu0 0
  %905 = vmatpush2.bf16.msra.mxu0 0
  %906 = vmatprep.subr.bf16.mxu0 0
  %907 = vmatpush2.bf16.msra.mxu0 0
  %908 = vmatprep.subr.bf16.mxu0 0
  %909 = vmatpush2.bf16.msra.mxu0 0
  %910 = vmatprep.mubr.bf16.mxu0 0
  %911 = vmatmul.mubr.bf16.gmra.mxu0 %v872
  %v912 = vpop.f32.mrf.mxu0
  %v913 = vadd.f32 0.0, %v912
  %v914 = vpop.f32.mrf.mxu0
  %v915 = vadd.f32 0.0, %v914
  %v916 = vpop.f32.mrf.mxu0
  %v917 = vpop.f32.mrf.mxu0
  %918 = vdwg.mxu0
  %919 = vmatprep.subr.bf16.mxu0 %v613
  %920 = vmatpush1.bf16.msra.mxu0 %v612
  %921 = vmatprep.subr.bf16.mxu0 %v609
  %922 = vmatpush1.bf16.msra.mxu0 %v608
  %923 = vmatprep.subr.bf16.mxu0 %v605
  %924 = vmatpush1.bf16.msra.mxu0 %v604
  %925 = vmatprep.subr.bf16.mxu0 %v601
  %926 = vmatpush1.bf16.msra.mxu0 %v600
  %927 = vmatprep.subr.bf16.mxu0 %v597
  %928 = vmatpush1.bf16.msra.mxu0 %v596
  %929 = vmatprep.subr.bf16.mxu0 %v593
  %930 = vmatpush1.bf16.msra.mxu0 %v592
  %931 = vmatprep.subr.bf16.mxu0 %v589
  %932 = vmatpush1.bf16.msra.mxu0 %v588
  %933 = vmatprep.subr.bf16.mxu0 %v585
  %934 = vmatpush1.bf16.msra.mxu0 %v584
  %935 = vmatprep.subr.bf16.mxu0 0
  %936 = vmatpush2.bf16.msra.mxu0 0
  %937 = vmatprep.subr.bf16.mxu0 0
  %938 = vmatpush2.bf16.msra.mxu0 0
  %939 = vmatprep.subr.bf16.mxu0 0
  %940 = vmatpush2.bf16.msra.mxu0 0
  %941 = vmatprep.subr.bf16.mxu0 0
  %942 = vmatpush2.bf16.msra.mxu0 0
  %943 = vmatprep.subr.bf16.mxu0 0
  %944 = vmatpush2.bf16.msra.mxu0 0
  %945 = vmatprep.subr.bf16.mxu0 0
  %946 = vmatpush2.bf16.msra.mxu0 0
  %947 = vmatprep.subr.bf16.mxu0 0
  %948 = vmatpush2.bf16.msra.mxu0 0
  %949 = vmatprep.subr.bf16.mxu0 0
  %950 = vmatpush2.bf16.msra.mxu0 0
  %951 = vmatprep.mubr.bf16.mxu0 0
  %952 = vmatmul.mubr.bf16.gmra.mxu0 %v872
  %v953 = vpop.f32.mrf.mxu0
  %v954 = vadd.f32 0.0, %v953
  %v955 = vpop.f32.mrf.mxu0
  %v956 = vadd.f32 0.0, %v955
  %v957 = vpop.f32.mrf.mxu0
  %v958 = vpop.f32.mrf.mxu0
  %959 = vdwg.mxu0
  %v960 = vadd.f32 %v874, %v913
  %v961 = vadd.f32 %v875, %v915
  %v962 = vadd.f32 %v876, %v954
  %v963 = vadd.f32 %v877, %v956
  %v964 = vxor.u32 %v960, 2147483648
  %v965 = vmul.f32 %v964, 1.442695
  %v966 = vpow.pop %v965
  %v967 = vadd.f32 %v966, 1.0
  %v968 = vrcp.pop %v967
  %v969 = vmul.f32 1.0, %v968
  %v970 = vxor.u32 %v961, 2147483648
  %v971 = vmul.f32 %v970, 1.442695
  %v972 = vpow.pop %v971
  %v973 = vadd.f32 %v972, 1.0
  %v974 = vrcp.pop %v973
  %v975 = vmul.f32 1.0, %v974
  %v976 = vtanh.pop %v962
  %v977 = vxor.u32 %v963, 2147483648
  %v978 = vmul.f32 %v977, 1.442695
  %v979 = vpow.pop %v978
  %v980 = vadd.f32 %v979, 1.0
  %v981 = vrcp.pop %v980
  %v982 = vmul.f32 1.0, %v981
  %v983 = vmul.f32 %v975, %v869
  %v984 = vmul.f32 %v969, %v976
  %v985 = vadd.f32 %v983, %v984
  %v986 = vtanh.pop %v985
  %v987 = vmul.f32 %v982, %v986
  %v988 = vpack.c.bf16 %v987, %v987
  %s989 = scalar_lea.vmem [#allocation2], 96
  %v990 = vld [vmem:[%s989] sm:$0xff]
  %v991 = vld [vmem:[%s989 + $0x8] sm:$0xff]
  %v992 = vld [vmem:[%s989 + $0x10] sm:$0xff]
  %v993 = vld [vmem:[%s989 + $0x18] sm:$0xff]
  %994 = vmatprep.subr.bf16.mxu0 %v611
  %995 = vmatpush1.bf16.msra.mxu0 %v610
  %996 = vmatprep.subr.bf16.mxu0 %v607
  %997 = vmatpush1.bf16.msra.mxu0 %v606
  %998 = vmatprep.subr.bf16.mxu0 %v603
  %999 = vmatpush1.bf16.msra.mxu0 %v602
  %1000 = vmatprep.subr.bf16.mxu0 %v599
  %1001 = vmatpush1.bf16.msra.mxu0 %v598
  %1002 = vmatprep.subr.bf16.mxu0 %v595
  %1003 = vmatpush1.bf16.msra.mxu0 %v594
  %1004 = vmatprep.subr.bf16.mxu0 %v591
  %1005 = vmatpush1.bf16.msra.mxu0 %v590
  %1006 = vmatprep.subr.bf16.mxu0 %v587
  %1007 = vmatpush1.bf16.msra.mxu0 %v586
  %1008 = vmatprep.subr.bf16.mxu0 %v583
  %1009 = vmatpush1.bf16.msra.mxu0 %v582
  %1010 = vmatprep.subr.bf16.mxu0 0
  %1011 = vmatpush2.bf16.msra.mxu0 0
  %1012 = vmatprep.subr.bf16.mxu0 0
  %1013 = vmatpush2.bf16.msra.mxu0 0
  %1014 = vmatprep.subr.bf16.mxu0 0
  %1015 = vmatpush2.bf16.msra.mxu0 0
  %1016 = vmatprep.subr.bf16.mxu0 0
  %1017 = vmatpush2.bf16.msra.mxu0 0
  %1018 = vmatprep.subr.bf16.mxu0 0
  %1019 = vmatpush2.bf16.msra.mxu0 0
  %1020 = vmatprep.subr.bf16.mxu0 0
  %1021 = vmatpush2.bf16.msra.mxu0 0
  %1022 = vmatprep.subr.bf16.mxu0 0
  %1023 = vmatpush2.bf16.msra.mxu0 0
  %1024 = vmatprep.subr.bf16.mxu0 0
  %1025 = vmatpush2.bf16.msra.mxu0 0
  %1026 = vmatprep.mubr.bf16.mxu0 0
  %1027 = vmatmul.mubr.bf16.gmra.mxu0 %v988
  %v1028 = vpop.f32.mrf.mxu0
  %v1029 = vadd.f32 0.0, %v1028
  %v1030 = vpop.f32.mrf.mxu0
  %v1031 = vadd.f32 0.0, %v1030
  %v1032 = vpop.f32.mrf.mxu0
  %v1033 = vpop.f32.mrf.mxu0
  %1034 = vdwg.mxu0
  %1035 = vmatprep.subr.bf16.mxu0 %v613
  %1036 = vmatpush1.bf16.msra.mxu0 %v612
  %1037 = vmatprep.subr.bf16.mxu0 %v609
  %1038 = vmatpush1.bf16.msra.mxu0 %v608
  %1039 = vmatprep.subr.bf16.mxu0 %v605
  %1040 = vmatpush1.bf16.msra.mxu0 %v604
  %1041 = vmatprep.subr.bf16.mxu0 %v601
  %1042 = vmatpush1.bf16.msra.mxu0 %v600
  %1043 = vmatprep.subr.bf16.mxu0 %v597
  %1044 = vmatpush1.bf16.msra.mxu0 %v596
  %1045 = vmatprep.subr.bf16.mxu0 %v593
  %1046 = vmatpush1.bf16.msra.mxu0 %v592
  %1047 = vmatprep.subr.bf16.mxu0 %v589
  %1048 = vmatpush1.bf16.msra.mxu0 %v588
  %1049 = vmatprep.subr.bf16.mxu0 %v585
  %1050 = vmatpush1.bf16.msra.mxu0 %v584
  %1051 = vmatprep.subr.bf16.mxu0 0
  %1052 = vmatpush2.bf16.msra.mxu0 0
  %1053 = vmatprep.subr.bf16.mxu0 0
  %1054 = vmatpush2.bf16.msra.mxu0 0
  %1055 = vmatprep.subr.bf16.mxu0 0
  %1056 = vmatpush2.bf16.msra.mxu0 0
  %1057 = vmatprep.subr.bf16.mxu0 0
  %1058 = vmatpush2.bf16.msra.mxu0 0
  %1059 = vmatprep.subr.bf16.mxu0 0
  %1060 = vmatpush2.bf16.msra.mxu0 0
  %1061 = vmatprep.subr.bf16.mxu0 0
  %1062 = vmatpush2.bf16.msra.mxu0 0
  %1063 = vmatprep.subr.bf16.mxu0 0
  %1064 = vmatpush2.bf16.msra.mxu0 0
  %1065 = vmatprep.subr.bf16.mxu0 0
  %1066 = vmatpush2.bf16.msra.mxu0 0
  %1067 = vmatprep.mubr.bf16.mxu0 0
  %1068 = vmatmul.mubr.bf16.gmra.mxu0 %v988
  %v1069 = vpop.f32.mrf.mxu0
  %v1070 = vadd.f32 0.0, %v1069
  %v1071 = vpop.f32.mrf.mxu0
  %v1072 = vadd.f32 0.0, %v1071
  %v1073 = vpop.f32.mrf.mxu0
  %v1074 = vpop.f32.mrf.mxu0
  %1075 = vdwg.mxu0
  %v1076 = vadd.f32 %v990, %v1029
  %v1077 = vadd.f32 %v991, %v1031
  %v1078 = vadd.f32 %v992, %v1070
  %v1079 = vadd.f32 %v993, %v1072
  %v1080 = vxor.u32 %v1076, 2147483648
  %v1081 = vmul.f32 %v1080, 1.442695
  %v1082 = vpow.pop %v1081
  %v1083 = vadd.f32 %v1082, 1.0
  %v1084 = vrcp.pop %v1083
  %v1085 = vmul.f32 1.0, %v1084
  %v1086 = vxor.u32 %v1077, 2147483648
  %v1087 = vmul.f32 %v1086, 1.442695
  %v1088 = vpow.pop %v1087
  %v1089 = vadd.f32 %v1088, 1.0
  %v1090 = vrcp.pop %v1089
  %v1091 = vmul.f32 1.0, %v1090
  %v1092 = vtanh.pop %v1078
  %v1093 = vxor.u32 %v1079, 2147483648
  %v1094 = vmul.f32 %v1093, 1.442695
  %v1095 = vpow.pop %v1094
  %v1096 = vadd.f32 %v1095, 1.0
  %v1097 = vrcp.pop %v1096
  %v1098 = vmul.f32 1.0, %v1097
  %v1099 = vmul.f32 %v1091, %v985
  %v1100 = vmul.f32 %v1085, %v1092
  %v1101 = vadd.f32 %v1099, %v1100
  %v1102 = vtanh.pop %v1101
  %v1103 = vmul.f32 %v1098, %v1102
  %v1104 = vpack.c.bf16 %v1103, %v1103
  %s1105 = scalar_lea.vmem [#allocation2], 128
  %v1106 = vld [vmem:[%s1105] sm:$0xff]
  %v1107 = vld [vmem:[%s1105 + $0x8] sm:$0xff]
  %v1108 = vld [vmem:[%s1105 + $0x10] sm:$0xff]
  %v1109 = vld [vmem:[%s1105 + $0x18] sm:$0xff]
  %1110 = vmatprep.subr.bf16.mxu0 %v611
  %1111 = vmatpush1.bf16.msra.mxu0 %v610
  %1112 = vmatprep.subr.bf16.mxu0 %v607
  %1113 = vmatpush1.bf16.msra.mxu0 %v606
  %1114 = vmatprep.subr.bf16.mxu0 %v603
  %1115 = vmatpush1.bf16.msra.mxu0 %v602
  %1116 = vmatprep.subr.bf16.mxu0 %v599
  %1117 = vmatpush1.bf16.msra.mxu0 %v598
  %1118 = vmatprep.subr.bf16.mxu0 %v595
  %1119 = vmatpush1.bf16.msra.mxu0 %v594
  %1120 = vmatprep.subr.bf16.mxu0 %v591
  %1121 = vmatpush1.bf16.msra.mxu0 %v590
  %1122 = vmatprep.subr.bf16.mxu0 %v587
  %1123 = vmatpush1.bf16.msra.mxu0 %v586
  %1124 = vmatprep.subr.bf16.mxu0 %v583
  %1125 = vmatpush1.bf16.msra.mxu0 %v582
  %1126 = vmatprep.subr.bf16.mxu0 0
  %1127 = vmatpush2.bf16.msra.mxu0 0
  %1128 = vmatprep.subr.bf16.mxu0 0
  %1129 = vmatpush2.bf16.msra.mxu0 0
  %1130 = vmatprep.subr.bf16.mxu0 0
  %1131 = vmatpush2.bf16.msra.mxu0 0
  %1132 = vmatprep.subr.bf16.mxu0 0
  %1133 = vmatpush2.bf16.msra.mxu0 0
  %1134 = vmatprep.subr.bf16.mxu0 0
  %1135 = vmatpush2.bf16.msra.mxu0 0
  %1136 = vmatprep.subr.bf16.mxu0 0
  %1137 = vmatpush2.bf16.msra.mxu0 0
  %1138 = vmatprep.subr.bf16.mxu0 0
  %1139 = vmatpush2.bf16.msra.mxu0 0
  %1140 = vmatprep.subr.bf16.mxu0 0
  %1141 = vmatpush2.bf16.msra.mxu0 0
  %1142 = vmatprep.mubr.bf16.mxu0 0
  %1143 = vmatmul.mubr.bf16.gmra.mxu0 %v1104
  %v1144 = vpop.f32.mrf.mxu0
  %v1145 = vadd.f32 0.0, %v1144
  %v1146 = vpop.f32.mrf.mxu0
  %v1147 = vadd.f32 0.0, %v1146
  %v1148 = vpop.f32.mrf.mxu0
  %v1149 = vpop.f32.mrf.mxu0
  %1150 = vdwg.mxu0
  %1151 = vmatprep.subr.bf16.mxu0 %v613
  %1152 = vmatpush1.bf16.msra.mxu0 %v612
  %1153 = vmatprep.subr.bf16.mxu0 %v609
  %1154 = vmatpush1.bf16.msra.mxu0 %v608
  %1155 = vmatprep.subr.bf16.mxu0 %v605
  %1156 = vmatpush1.bf16.msra.mxu0 %v604
  %1157 = vmatprep.subr.bf16.mxu0 %v601
  %1158 = vmatpush1.bf16.msra.mxu0 %v600
  %1159 = vmatprep.subr.bf16.mxu0 %v597
  %1160 = vmatpush1.bf16.msra.mxu0 %v596
  %1161 = vmatprep.subr.bf16.mxu0 %v593
  %1162 = vmatpush1.bf16.msra.mxu0 %v592
  %1163 = vmatprep.subr.bf16.mxu0 %v589
  %1164 = vmatpush1.bf16.msra.mxu0 %v588
  %1165 = vmatprep.subr.bf16.mxu0 %v585
  %1166 = vmatpush1.bf16.msra.mxu0 %v584
  %1167 = vmatprep.subr.bf16.mxu0 0
  %1168 = vmatpush2.bf16.msra.mxu0 0
  %1169 = vmatprep.subr.bf16.mxu0 0
  %1170 = vmatpush2.bf16.msra.mxu0 0
  %1171 = vmatprep.subr.bf16.mxu0 0
  %1172 = vmatpush2.bf16.msra.mxu0 0
  %1173 = vmatprep.subr.bf16.mxu0 0
  %1174 = vmatpush2.bf16.msra.mxu0 0
  %1175 = vmatprep.subr.bf16.mxu0 0
  %1176 = vmatpush2.bf16.msra.mxu0 0
  %1177 = vmatprep.subr.bf16.mxu0 0
  %1178 = vmatpush2.bf16.msra.mxu0 0
  %1179 = vmatprep.subr.bf16.mxu0 0
  %1180 = vmatpush2.bf16.msra.mxu0 0
  %1181 = vmatprep.subr.bf16.mxu0 0
  %1182 = vmatpush2.bf16.msra.mxu0 0
  %1183 = vmatprep.mubr.bf16.mxu0 0
  %1184 = vmatmul.mubr.bf16.gmra.mxu0 %v1104
  %v1185 = vpop.f32.mrf.mxu0
  %v1186 = vadd.f32 0.0, %v1185
  %v1187 = vpop.f32.mrf.mxu0
  %v1188 = vadd.f32 0.0, %v1187
  %v1189 = vpop.f32.mrf.mxu0
  %v1190 = vpop.f32.mrf.mxu0
  %1191 = vdwg.mxu0
  %v1192 = vadd.f32 %v1106, %v1145
  %v1193 = vadd.f32 %v1107, %v1147
  %v1194 = vadd.f32 %v1108, %v1186
  %v1195 = vadd.f32 %v1109, %v1188
  %v1196 = vxor.u32 %v1192, 2147483648
  %v1197 = vmul.f32 %v1196, 1.442695
  %v1198 = vpow.pop %v1197
  %v1199 = vadd.f32 %v1198, 1.0
  %v1200 = vrcp.pop %v1199
  %v1201 = vmul.f32 1.0, %v1200
  %v1202 = vxor.u32 %v1193, 2147483648
  %v1203 = vmul.f32 %v1202, 1.442695
  %v1204 = vpow.pop %v1203
  %v1205 = vadd.f32 %v1204, 1.0
  %v1206 = vrcp.pop %v1205
  %v1207 = vmul.f32 1.0, %v1206
  %v1208 = vtanh.pop %v1194
  %v1209 = vxor.u32 %v1195, 2147483648
  %v1210 = vmul.f32 %v1209, 1.442695
  %v1211 = vpow.pop %v1210
  %v1212 = vadd.f32 %v1211, 1.0
  %v1213 = vrcp.pop %v1212
  %v1214 = vmul.f32 1.0, %v1213
  %v1215 = vmul.f32 %v1207, %v1101
  %v1216 = vmul.f32 %v1201, %v1208
  %v1217 = vadd.f32 %v1215, %v1216
  %v1218 = vtanh.pop %v1217
  %v1219 = vmul.f32 %v1214, %v1218
  %v1220 = vpack.c.bf16 %v1219, %v1219
  %s1221 = scalar_lea.vmem [#allocation2], 160
  %v1222 = vld [vmem:[%s1221] sm:$0xff]
  %v1223 = vld [vmem:[%s1221 + $0x8] sm:$0xff]
  %v1224 = vld [vmem:[%s1221 + $0x10] sm:$0xff]
  %v1225 = vld [vmem:[%s1221 + $0x18] sm:$0xff]
  %1226 = vmatprep.subr.bf16.mxu0 %v611
  %1227 = vmatpush1.bf16.msra.mxu0 %v610
  %1228 = vmatprep.subr.bf16.mxu0 %v607
  %1229 = vmatpush1.bf16.msra.mxu0 %v606
  %1230 = vmatprep.subr.bf16.mxu0 %v603
  %1231 = vmatpush1.bf16.msra.mxu0 %v602
  %1232 = vmatprep.subr.bf16.mxu0 %v599
  %1233 = vmatpush1.bf16.msra.mxu0 %v598
  %1234 = vmatprep.subr.bf16.mxu0 %v595
  %1235 = vmatpush1.bf16.msra.mxu0 %v594
  %1236 = vmatprep.subr.bf16.mxu0 %v591
  %1237 = vmatpush1.bf16.msra.mxu0 %v590
  %1238 = vmatprep.subr.bf16.mxu0 %v587
  %1239 = vmatpush1.bf16.msra.mxu0 %v586
  %1240 = vmatprep.subr.bf16.mxu0 %v583
  %1241 = vmatpush1.bf16.msra.mxu0 %v582
  %1242 = vmatprep.subr.bf16.mxu0 0
  %1243 = vmatpush2.bf16.msra.mxu0 0
  %1244 = vmatprep.subr.bf16.mxu0 0
  %1245 = vmatpush2.bf16.msra.mxu0 0
  %1246 = vmatprep.subr.bf16.mxu0 0
  %1247 = vmatpush2.bf16.msra.mxu0 0
  %1248 = vmatprep.subr.bf16.mxu0 0
  %1249 = vmatpush2.bf16.msra.mxu0 0
  %1250 = vmatprep.subr.bf16.mxu0 0
  %1251 = vmatpush2.bf16.msra.mxu0 0
  %1252 = vmatprep.subr.bf16.mxu0 0
  %1253 = vmatpush2.bf16.msra.mxu0 0
  %1254 = vmatprep.subr.bf16.mxu0 0
  %1255 = vmatpush2.bf16.msra.mxu0 0
  %1256 = vmatprep.subr.bf16.mxu0 0
  %1257 = vmatpush2.bf16.msra.mxu0 0
  %1258 = vmatprep.mubr.bf16.mxu0 0
  %1259 = vmatmul.mubr.bf16.gmra.mxu0 %v1220
  %v1260 = vpop.f32.mrf.mxu0
  %v1261 = vadd.f32 0.0, %v1260
  %v1262 = vpop.f32.mrf.mxu0
  %v1263 = vadd.f32 0.0, %v1262
  %v1264 = vpop.f32.mrf.mxu0
  %v1265 = vpop.f32.mrf.mxu0
  %1266 = vdwg.mxu0
  %1267 = vmatprep.subr.bf16.mxu0 %v613
  %1268 = vmatpush1.bf16.msra.mxu0 %v612
  %1269 = vmatprep.subr.bf16.mxu0 %v609
  %1270 = vmatpush1.bf16.msra.mxu0 %v608
  %1271 = vmatprep.subr.bf16.mxu0 %v605
  %1272 = vmatpush1.bf16.msra.mxu0 %v604
  %1273 = vmatprep.subr.bf16.mxu0 %v601
  %1274 = vmatpush1.bf16.msra.mxu0 %v600
  %1275 = vmatprep.subr.bf16.mxu0 %v597
  %1276 = vmatpush1.bf16.msra.mxu0 %v596
  %1277 = vmatprep.subr.bf16.mxu0 %v593
  %1278 = vmatpush1.bf16.msra.mxu0 %v592
  %1279 = vmatprep.subr.bf16.mxu0 %v589
  %1280 = vmatpush1.bf16.msra.mxu0 %v588
  %1281 = vmatprep.subr.bf16.mxu0 %v585
  %1282 = vmatpush1.bf16.msra.mxu0 %v584
  %1283 = vmatprep.subr.bf16.mxu0 0
  %1284 = vmatpush2.bf16.msra.mxu0 0
  %1285 = vmatprep.subr.bf16.mxu0 0
  %1286 = vmatpush2.bf16.msra.mxu0 0
  %1287 = vmatprep.subr.bf16.mxu0 0
  %1288 = vmatpush2.bf16.msra.mxu0 0
  %1289 = vmatprep.subr.bf16.mxu0 0
  %1290 = vmatpush2.bf16.msra.mxu0 0
  %1291 = vmatprep.subr.bf16.mxu0 0
  %1292 = vmatpush2.bf16.msra.mxu0 0
  %1293 = vmatprep.subr.bf16.mxu0 0
  %1294 = vmatpush2.bf16.msra.mxu0 0
  %1295 = vmatprep.subr.bf16.mxu0 0
  %1296 = vmatpush2.bf16.msra.mxu0 0
  %1297 = vmatprep.subr.bf16.mxu0 0
  %1298 = vmatpush2.bf16.msra.mxu0 0
  %1299 = vmatprep.mubr.bf16.mxu0 0
  %1300 = vmatmul.mubr.bf16.gmra.mxu0 %v1220
  %v1301 = vpop.f32.mrf.mxu0
  %v1302 = vadd.f32 0.0, %v1301
  %v1303 = vpop.f32.mrf.mxu0
  %v1304 = vadd.f32 0.0, %v1303
  %v1305 = vpop.f32.mrf.mxu0
  %v1306 = vpop.f32.mrf.mxu0
  %1307 = vdwg.mxu0
  %v1308 = vadd.f32 %v1222, %v1261
  %v1309 = vadd.f32 %v1223, %v1263
  %v1310 = vadd.f32 %v1224, %v1302
  %v1311 = vadd.f32 %v1225, %v1304
  %v1312 = vxor.u32 %v1308, 2147483648
  %v1313 = vmul.f32 %v1312, 1.442695
  %v1314 = vpow.pop %v1313
  %v1315 = vadd.f32 %v1314, 1.0
  %v1316 = vrcp.pop %v1315
  %v1317 = vmul.f32 1.0, %v1316
  %v1318 = vxor.u32 %v1309, 2147483648
  %v1319 = vmul.f32 %v1318, 1.442695
  %v1320 = vpow.pop %v1319
  %v1321 = vadd.f32 %v1320, 1.0
  %v1322 = vrcp.pop %v1321
  %v1323 = vmul.f32 1.0, %v1322
  %v1324 = vtanh.pop %v1310
  %v1325 = vxor.u32 %v1311, 2147483648
  %v1326 = vmul.f32 %v1325, 1.442695
  %v1327 = vpow.pop %v1326
  %v1328 = vadd.f32 %v1327, 1.0
  %v1329 = vrcp.pop %v1328
  %v1330 = vmul.f32 1.0, %v1329
  %v1331 = vmul.f32 %v1323, %v1217
  %v1332 = vmul.f32 %v1317, %v1324
  %v1333 = vadd.f32 %v1331, %v1332
  %v1334 = vtanh.pop %v1333
  %v1335 = vmul.f32 %v1330, %v1334
  %v1336 = vpack.c.bf16 %v1335, %v1335
  %s1337 = scalar_lea.vmem [#allocation2], 192
  %v1338 = vld [vmem:[%s1337] sm:$0xff]
  %v1339 = vld [vmem:[%s1337 + $0x8] sm:$0xff]
  %v1340 = vld [vmem:[%s1337 + $0x10] sm:$0xff]
  %v1341 = vld [vmem:[%s1337 + $0x18] sm:$0xff]
  %1342 = vmatprep.subr.bf16.mxu0 %v611
  %1343 = vmatpush1.bf16.msra.mxu0 %v610
  %1344 = vmatprep.subr.bf16.mxu0 %v607
  %1345 = vmatpush1.bf16.msra.mxu0 %v606
  %1346 = vmatprep.subr.bf16.mxu0 %v603
  %1347 = vmatpush1.bf16.msra.mxu0 %v602
  %1348 = vmatprep.subr.bf16.mxu0 %v599
  %1349 = vmatpush1.bf16.msra.mxu0 %v598
  %1350 = vmatprep.subr.bf16.mxu0 %v595
  %1351 = vmatpush1.bf16.msra.mxu0 %v594
  %1352 = vmatprep.subr.bf16.mxu0 %v591
  %1353 = vmatpush1.bf16.msra.mxu0 %v590
  %1354 = vmatprep.subr.bf16.mxu0 %v587
  %1355 = vmatpush1.bf16.msra.mxu0 %v586
  %1356 = vmatprep.subr.bf16.mxu0 %v583
  %1357 = vmatpush1.bf16.msra.mxu0 %v582
  %1358 = vmatprep.subr.bf16.mxu0 0
  %1359 = vmatpush2.bf16.msra.mxu0 0
  %1360 = vmatprep.subr.bf16.mxu0 0
  %1361 = vmatpush2.bf16.msra.mxu0 0
  %1362 = vmatprep.subr.bf16.mxu0 0
  %1363 = vmatpush2.bf16.msra.mxu0 0
  %1364 = vmatprep.subr.bf16.mxu0 0
  %1365 = vmatpush2.bf16.msra.mxu0 0
  %1366 = vmatprep.subr.bf16.mxu0 0
  %1367 = vmatpush2.bf16.msra.mxu0 0
  %1368 = vmatprep.subr.bf16.mxu0 0
  %1369 = vmatpush2.bf16.msra.mxu0 0
  %1370 = vmatprep.subr.bf16.mxu0 0
  %1371 = vmatpush2.bf16.msra.mxu0 0
  %1372 = vmatprep.subr.bf16.mxu0 0
  %1373 = vmatpush2.bf16.msra.mxu0 0
  %1374 = vmatprep.mubr.bf16.mxu0 0
  %1375 = vmatmul.mubr.bf16.gmra.mxu0 %v1336
  %v1376 = vpop.f32.mrf.mxu0
  %v1377 = vadd.f32 0.0, %v1376
  %v1378 = vpop.f32.mrf.mxu0
  %v1379 = vadd.f32 0.0, %v1378
  %v1380 = vpop.f32.mrf.mxu0
  %v1381 = vpop.f32.mrf.mxu0
  %1382 = vdwg.mxu0
  %1383 = vmatprep.subr.bf16.mxu0 %v613
  %1384 = vmatpush1.bf16.msra.mxu0 %v612
  %1385 = vmatprep.subr.bf16.mxu0 %v609
  %1386 = vmatpush1.bf16.msra.mxu0 %v608
  %1387 = vmatprep.subr.bf16.mxu0 %v605
  %1388 = vmatpush1.bf16.msra.mxu0 %v604
  %1389 = vmatprep.subr.bf16.mxu0 %v601
  %1390 = vmatpush1.bf16.msra.mxu0 %v600
  %1391 = vmatprep.subr.bf16.mxu0 %v597
  %1392 = vmatpush1.bf16.msra.mxu0 %v596
  %1393 = vmatprep.subr.bf16.mxu0 %v593
  %1394 = vmatpush1.bf16.msra.mxu0 %v592
  %1395 = vmatprep.subr.bf16.mxu0 %v589
  %1396 = vmatpush1.bf16.msra.mxu0 %v588
  %1397 = vmatprep.subr.bf16.mxu0 %v585
  %1398 = vmatpush1.bf16.msra.mxu0 %v584
  %1399 = vmatprep.subr.bf16.mxu0 0
  %1400 = vmatpush2.bf16.msra.mxu0 0
  %1401 = vmatprep.subr.bf16.mxu0 0
  %1402 = vmatpush2.bf16.msra.mxu0 0
  %1403 = vmatprep.subr.bf16.mxu0 0
  %1404 = vmatpush2.bf16.msra.mxu0 0
  %1405 = vmatprep.subr.bf16.mxu0 0
  %1406 = vmatpush2.bf16.msra.mxu0 0
  %1407 = vmatprep.subr.bf16.mxu0 0
  %1408 = vmatpush2.bf16.msra.mxu0 0
  %1409 = vmatprep.subr.bf16.mxu0 0
  %1410 = vmatpush2.bf16.msra.mxu0 0
  %1411 = vmatprep.subr.bf16.mxu0 0
  %1412 = vmatpush2.bf16.msra.mxu0 0
  %1413 = vmatprep.subr.bf16.mxu0 0
  %1414 = vmatpush2.bf16.msra.mxu0 0
  %1415 = vmatprep.mubr.bf16.mxu0 0
  %1416 = vmatmul.mubr.bf16.gmra.mxu0 %v1336
  %v1417 = vpop.f32.mrf.mxu0
  %v1418 = vadd.f32 0.0, %v1417
  %v1419 = vpop.f32.mrf.mxu0
  %v1420 = vadd.f32 0.0, %v1419
  %v1421 = vpop.f32.mrf.mxu0
  %v1422 = vpop.f32.mrf.mxu0
  %1423 = vdwg.mxu0
  %v1424 = vadd.f32 %v1338, %v1377
  %v1425 = vadd.f32 %v1339, %v1379
  %v1426 = vadd.f32 %v1340, %v1418
  %v1427 = vadd.f32 %v1341, %v1420
  %v1428 = vxor.u32 %v1424, 2147483648
  %v1429 = vmul.f32 %v1428, 1.442695
  %v1430 = vpow.pop %v1429
  %v1431 = vadd.f32 %v1430, 1.0
  %v1432 = vrcp.pop %v1431
  %v1433 = vmul.f32 1.0, %v1432
  %v1434 = vxor.u32 %v1425, 2147483648
  %v1435 = vmul.f32 %v1434, 1.442695
  %v1436 = vpow.pop %v1435
  %v1437 = vadd.f32 %v1436, 1.0
  %v1438 = vrcp.pop %v1437
  %v1439 = vmul.f32 1.0, %v1438
  %v1440 = vtanh.pop %v1426
  %v1441 = vxor.u32 %v1427, 2147483648
  %v1442 = vmul.f32 %v1441, 1.442695
  %v1443 = vpow.pop %v1442
  %v1444 = vadd.f32 %v1443, 1.0
  %v1445 = vrcp.pop %v1444
  %v1446 = vmul.f32 1.0, %v1445
  %v1447 = vmul.f32 %v1439, %v1333
  %v1448 = vmul.f32 %v1433, %v1440
  %v1449 = vadd.f32 %v1447, %v1448
  %v1450 = vtanh.pop %v1449
  %v1451 = vmul.f32 %v1446, %v1450
  %v1452 = vpack.c.bf16 %v1451, %v1451
  %s1453 = scalar_lea.vmem [#allocation2], 224
  %v1454 = vld [vmem:[%s1453] sm:$0xff]
  %v1455 = vld [vmem:[%s1453 + $0x8] sm:$0xff]
  %v1456 = vld [vmem:[%s1453 + $0x10] sm:$0xff]
  %v1457 = vld [vmem:[%s1453 + $0x18] sm:$0xff]
  %1458 = vmatprep.subr.bf16.mxu0 %v611
  %1459 = vmatpush1.bf16.msra.mxu0 %v610
  %1460 = vmatprep.subr.bf16.mxu0 %v607
  %1461 = vmatpush1.bf16.msra.mxu0 %v606
  %1462 = vmatprep.subr.bf16.mxu0 %v603
  %1463 = vmatpush1.bf16.msra.mxu0 %v602
  %1464 = vmatprep.subr.bf16.mxu0 %v599
  %1465 = vmatpush1.bf16.msra.mxu0 %v598
  %1466 = vmatprep.subr.bf16.mxu0 %v595
  %1467 = vmatpush1.bf16.msra.mxu0 %v594
  %1468 = vmatprep.subr.bf16.mxu0 %v591
  %1469 = vmatpush1.bf16.msra.mxu0 %v590
  %1470 = vmatprep.subr.bf16.mxu0 %v587
  %1471 = vmatpush1.bf16.msra.mxu0 %v586
  %1472 = vmatprep.subr.bf16.mxu0 %v583
  %1473 = vmatpush1.bf16.msra.mxu0 %v582
  %1474 = vmatprep.subr.bf16.mxu0 0
  %1475 = vmatpush2.bf16.msra.mxu0 0
  %1476 = vmatprep.subr.bf16.mxu0 0
  %1477 = vmatpush2.bf16.msra.mxu0 0
  %1478 = vmatprep.subr.bf16.mxu0 0
  %1479 = vmatpush2.bf16.msra.mxu0 0
  %1480 = vmatprep.subr.bf16.mxu0 0
  %1481 = vmatpush2.bf16.msra.mxu0 0
  %1482 = vmatprep.subr.bf16.mxu0 0
  %1483 = vmatpush2.bf16.msra.mxu0 0
  %1484 = vmatprep.subr.bf16.mxu0 0
  %1485 = vmatpush2.bf16.msra.mxu0 0
  %1486 = vmatprep.subr.bf16.mxu0 0
  %1487 = vmatpush2.bf16.msra.mxu0 0
  %1488 = vmatprep.subr.bf16.mxu0 0
  %1489 = vmatpush2.bf16.msra.mxu0 0
  %1490 = vmatprep.mubr.bf16.mxu0 0
  %1491 = vmatmul.mubr.bf16.gmra.mxu0 %v1452
  %v1492 = vpop.f32.mrf.mxu0
  %v1493 = vadd.f32 0.0, %v1492
  %v1494 = vpop.f32.mrf.mxu0
  %v1495 = vadd.f32 0.0, %v1494
  %v1496 = vpop.f32.mrf.mxu0
  %v1497 = vpop.f32.mrf.mxu0
  %1498 = vdwg.mxu0
  %1499 = vmatprep.subr.bf16.mxu0 %v613
  %1500 = vmatpush1.bf16.msra.mxu0 %v612
  %1501 = vmatprep.subr.bf16.mxu0 %v609
  %1502 = vmatpush1.bf16.msra.mxu0 %v608
  %1503 = vmatprep.subr.bf16.mxu0 %v605
  %1504 = vmatpush1.bf16.msra.mxu0 %v604
  %1505 = vmatprep.subr.bf16.mxu0 %v601
  %1506 = vmatpush1.bf16.msra.mxu0 %v600
  %1507 = vmatprep.subr.bf16.mxu0 %v597
  %1508 = vmatpush1.bf16.msra.mxu0 %v596
  %1509 = vmatprep.subr.bf16.mxu0 %v593
  %1510 = vmatpush1.bf16.msra.mxu0 %v592
  %1511 = vmatprep.subr.bf16.mxu0 %v589
  %1512 = vmatpush1.bf16.msra.mxu0 %v588
  %1513 = vmatprep.subr.bf16.mxu0 %v585
  %1514 = vmatpush1.bf16.msra.mxu0 %v584
  %1515 = vmatprep.subr.bf16.mxu0 0
  %1516 = vmatpush2.bf16.msra.mxu0 0
  %1517 = vmatprep.subr.bf16.mxu0 0
  %1518 = vmatpush2.bf16.msra.mxu0 0
  %1519 = vmatprep.subr.bf16.mxu0 0
  %1520 = vmatpush2.bf16.msra.mxu0 0
  %1521 = vmatprep.subr.bf16.mxu0 0
  %1522 = vmatpush2.bf16.msra.mxu0 0
  %1523 = vmatprep.subr.bf16.mxu0 0
  %1524 = vmatpush2.bf16.msra.mxu0 0
  %1525 = vmatprep.subr.bf16.mxu0 0
  %1526 = vmatpush2.bf16.msra.mxu0 0
  %1527 = vmatprep.subr.bf16.mxu0 0
  %1528 = vmatpush2.bf16.msra.mxu0 0
  %1529 = vmatprep.subr.bf16.mxu0 0
  %1530 = vmatpush2.bf16.msra.mxu0 0
  %1531 = vmatprep.mubr.bf16.mxu0 0
  %1532 = vmatmul.mubr.bf16.gmra.mxu0 %v1452
  %v1533 = vpop.f32.mrf.mxu0
  %v1534 = vadd.f32 0.0, %v1533
  %v1535 = vpop.f32.mrf.mxu0
  %v1536 = vadd.f32 0.0, %v1535
  %v1537 = vpop.f32.mrf.mxu0
  %v1538 = vpop.f32.mrf.mxu0
  %1539 = vdwg.mxu0
  %v1540 = vadd.f32 %v1454, %v1493
  %v1541 = vadd.f32 %v1455, %v1495
  %v1542 = vadd.f32 %v1456, %v1534
  %v1543 = vadd.f32 %v1457, %v1536
  %v1544 = vxor.u32 %v1540, 2147483648
  %v1545 = vmul.f32 %v1544, 1.442695
  %v1546 = vpow.pop %v1545
  %v1547 = vadd.f32 %v1546, 1.0
  %v1548 = vrcp.pop %v1547
  %v1549 = vmul.f32 1.0, %v1548
  %v1550 = vxor.u32 %v1541, 2147483648
  %v1551 = vmul.f32 %v1550, 1.442695
  %v1552 = vpow.pop %v1551
  %v1553 = vadd.f32 %v1552, 1.0
  %v1554 = vrcp.pop %v1553
  %v1555 = vmul.f32 1.0, %v1554
  %v1556 = vtanh.pop %v1542
  %v1557 = vxor.u32 %v1543, 2147483648
  %v1558 = vmul.f32 %v1557, 1.442695
  %v1559 = vpow.pop %v1558
  %v1560 = vadd.f32 %v1559, 1.0
  %v1561 = vrcp.pop %v1560
  %v1562 = vmul.f32 1.0, %v1561
  %v1563 = vmul.f32 %v1555, %v1449
  %v1564 = vmul.f32 %v1549, %v1556
  %v1565 = vadd.f32 %v1563, %v1564
  %v1566 = vtanh.pop %v1565
  %v1567 = vmul.f32 %v1562, %v1566
  %v1568 = vpack.c.bf16 %v1567, %v1567
  %1569 = vst [vmem:[#allocation3] sm:$0xf] %v1568
  %1570 = vst [vmem:[#allocation4] sm:$0xff] %v1565
  // Predicated region
  $region22: #{lstm_classifier_forward.1} parent=0 // pred_check
    %p1571 = pneg %p18
  $region23: #{lstm_classifier_forward.1} parent=0 // pred_check_branch
    %1573 = sbr.rel (%p1571) target = $region25
  $region24: #{lstm_classifier_forward.1} parent=0 // pred_region
    %v1574 = vunpack.c.l.bf16 %v1568
    %1575 = vst [vmem:[%s4] sm:$0xff] %v1574
  $region25: #{lstm_classifier_forward.1} parent=0 // pred_fallthru
    _
  // Predicated region
  $region26: #{lstm_classifier_forward.1} parent=0 // pred_check
    _
  $region27: #{lstm_classifier_forward.1} parent=0 // pred_check_branch
    %1577 = sbr.rel (0) target = $region29
  $region28: #{lstm_classifier_forward.1} parent=0 // pred_region
    _
  $region29: #{lstm_classifier_forward.1} parent=0 // pred_fallthru
    _
  // Predicated region
  $region30: #{lstm_classifier_forward.1} parent=0 // pred_check
    _
  $region31: #{lstm_classifier_forward.1} parent=0 // pred_check_branch
    %1579 = sbr.rel (0) target = $region33
  $region32: #{lstm_classifier_forward.1} parent=0 // pred_region
    _
  $region33: #{lstm_classifier_forward.1} parent=0 // pred_fallthru
    _

</llo_original>
